<compile_context>
chip_gen: v6e
topology: v6e:2x2x1
jax: 0.10.0
libtpu: 0.0.40
codegen_flags: <defaults>
</compile_context>

<pallas_src>
from functools import partial

import jax
import jax.numpy as jnp
from jax.experimental import pallas as pl
from jax.experimental.pallas import tpu as pltpu


def _decoder_kernel(x_ref, wih_ref, whh_ref, b_ref, wfc_ref, bfc_ref,
                    out_ref, xp_buf, h_buf, *, T, Bp, H):
    """Fused bidirectional LSTM + FC.

    x_ref   : (T*Bp, 2C)   row t*Bp+b = [x[t, b] | x[T-1-t, b]]
    wih_ref : (2C, 8H)     block-structured input->gate weights (both dirs)
    whh_ref : (2H, 8H)     block-structured hidden->gate weights (both dirs)
    b_ref   : (1, 8H)      combined biases (b_ih + b_hh), both directions
    wfc_ref : (2H, F)      fc weight (pre-transposed), F = 4H
    bfc_ref : (1, F)
    out_ref : (T*Bp, F)
    """
    H2 = 2 * H

    # Both directions' input projections for all timesteps in one 256-wide
    # MXU matmul, with the biases folded in here so the serial recurrence
    # below carries no broadcast add.
    xp_buf[...] = (jnp.dot(x_ref[...], wih_ref[...],
                           preferred_element_type=jnp.float32) + b_ref[...])

    whh = whh_ref[...]

    def step(t, carry):
        h, c = carry                                    # (Bp, 2H): [fwd | bwd]
        row_f = pl.multiple_of(t * Bp, Bp)              # fwd chain: time t
        row_b = pl.multiple_of((T - 1 - t) * Bp, Bp)    # bwd chain: time T-1-t

        xp = xp_buf[pl.ds(row_f, Bp), :]                # (Bp, 8H)
        # One 256-wide recurrence matmul covers both directions.
        gates = xp + jnp.dot(h, whh, preferred_element_type=jnp.float32)

        sg = jax.nn.sigmoid(gates)                      # single full-width pass
        i = sg[:, 0:H2]
        f = sg[:, H2:2 * H2]
        g = jnp.tanh(gates[:, 2 * H2:3 * H2])           # tanh only on g block
        o = sg[:, 3 * H2:4 * H2]

        c_new = f * c + i * g
        h_new = o * jnp.tanh(c_new)

        # Scatter into the hcat buffer: forward half at its own time index,
        # backward half at the time index it just processed.
        h_buf[pl.ds(row_f, Bp), 0:H] = h_new[:, 0:H]
        h_buf[pl.ds(row_b, Bp), H:H2] = h_new[:, H:H2]
        return h_new, c_new

    h0 = jnp.zeros((Bp, H2), jnp.float32)
    c0 = jnp.zeros((Bp, H2), jnp.float32)
    jax.lax.fori_loop(0, T, step, (h0, c0), unroll=True)

    # Final FC (Linear(2H, 4H)): one lane-dense (T*Bp,2H)x(2H,4H) MXU matmul.
    out_ref[...] = (jnp.dot(h_buf[...], wfc_ref[...],
                            preferred_element_type=jnp.float32) + bfc_ref[...])


def _pack_params(params):
    """Build the block-structured / gate-interleaved kernel weights."""
    H = params["whh_f"].shape[0]

    def scatter(w4, d):
        # Place the 4 PyTorch-ordered gate blocks (i,f,g,o) of one direction
        # into the interleaved 8H layout [i_f,i_b,f_f,f_b,g_f,g_b,o_f,o_b].
        z = jnp.zeros(w4.shape[:-1] + (H,), w4.dtype)
        cols = []
        for k in range(4):
            blk = w4[..., k * H:(k + 1) * H]
            cols += ([blk, z] if d == 0 else [z, blk])
        return jnp.concatenate(cols, axis=-1)

    wih = jnp.concatenate([scatter(params["wih_f"], 0),
                           scatter(params["wih_b"], 1)], axis=0)   # (2C, 8H)
    whh = jnp.concatenate([scatter(params["whh_f"], 0),
                           scatter(params["whh_b"], 1)], axis=0)   # (2H, 8H)
    b_all = scatter(params["b_f"], 0) + scatter(params["b_b"], 1)  # (1, 8H)
    return wih, whh, b_all, params["wfc"], params["bfc"]


def sequence_decoder(x_nchw, params):
    """SequenceDecoder(type='rnn') forward. x_nchw: (B, C, 1, W) -> (B, W, 4H)."""
    B, C, Hsp, W = x_nchw.shape
    assert Hsp == 1, "DecoderWithRNN squeezes axis=2; spatial height must be 1"
    T = W
    H = params["whh_f"].shape[0]
    F = params["wfc"].shape[1]
    Bp = -(-B // 8) * 8                      # pad batch to a full sublane group

    wih, whh, b_all, wfc, bfc = _pack_params(params)

    # NCHW -> time-major (T, B, C) in ONE transpose, pad batch, and append the
    # time-reversed sequence as extra "channels" so one matmul yields both
    # directions' input projections.
    x_t = jnp.transpose(x_nchw[:, :, 0, :], (2, 0, 1)).astype(jnp.float32)  # (T,B,C)
    x_t = jnp.pad(x_t, ((0, 0), (0, Bp - B), (0, 0)))                       # (T,Bp,C)
    x_cat = jnp.concatenate([x_t, x_t[::-1]], axis=-1).reshape(T * Bp, 2 * C)

    vmem = pl.BlockSpec(memory_space=pltpu.MemorySpace.VMEM)
    out2d = pl.pallas_call(
        partial(_decoder_kernel, T=T, Bp=Bp, H=H),
        out_shape=jax.ShapeDtypeStruct((T * Bp, F), jnp.float32),
        in_specs=[vmem] * 6,
        out_specs=vmem,
        scratch_shapes=[
            pltpu.VMEM((T * Bp, 8 * H), jnp.float32),   # fused input projections
            pltpu.VMEM((T * Bp, 2 * H), jnp.float32),   # hcat = [h_fwd | h_bwd]
        ],
        # TODO(synk): for production T/B add a batch grid axis marked
        # "parallel" (v7x: 2 TensorCores) and tile via BlockSpec so the
        # working set respects v7x's 64 MiB VMEM; optionally bf16 weights.
    )(x_cat, wih, whh, b_all, wfc, bfc)

    out = out2d.reshape(T, Bp, F)[:, :B]     # drop batch padding
    return jnp.transpose(out, (1, 0, 2))     # (B, T, F)


def init_params(key, in_channels, hidden):
    """Deterministic synthetic parameters (shapes follow nn.LSTM / nn.Linear)."""
    H = hidden
    F = 4 * H            # fc_out = hidden_size * 4
    ks = jax.random.split(key, 8)
    s = 0.1

    def mk(k, shape):
        return jax.random.normal(k, shape, dtype=jnp.float32) * s

    return {
        # stored pre-transposed: (in, 4H), (H, 4H); PyTorch gate order i,f,g,o
        "wih_f": mk(ks[0], (in_channels, 4 * H)),
        "whh_f": mk(ks[1], (H, 4 * H)),
        "b_f":   mk(ks[2], (1, 4 * H)),   # b_ih + b_hh combined
        "wih_b": mk(ks[3], (in_channels, 4 * H)),
        "whh_b": mk(ks[4], (H, 4 * H)),
        "b_b":   mk(ks[5], (1, 4 * H)),
        "wfc":   mk(ks[6], (2 * H, F)),   # Linear(2H, 4H), pre-transposed
        "bfc":   mk(ks[7], (1, F)),
    }


def reference(x_nchw, params):
    """Pure-JAX reference matching PyTorch LSTM/Linear semantics."""
    B, C, _, W = x_nchw.shape
    H = params["whh_f"].shape[0]
    x_btc = jnp.transpose(x_nchw[:, :, 0, :], (0, 2, 1)).astype(jnp.float32)
    x_tbc = jnp.transpose(x_btc, (1, 0, 2))

    def run_dir(wih, whh, b, reverse):
        def step(carry, x_t):
            h, c = carry
            gates = x_t @ wih + h @ whh + b
            i = jax.nn.sigmoid(gates[:, :H])
            f = jax.nn.sigmoid(gates[:, H:2 * H])
            g = jnp.tanh(gates[:, 2 * H:3 * H])
            o = jax.nn.sigmoid(gates[:, 3 * H:])
            c = f * c + i * g
            h = o * jnp.tanh(c)
            return (h, c), h
        xs = x_tbc[::-1] if reverse else x_tbc
        init = (jnp.zeros((B, H), jnp.float32), jnp.zeros((B, H), jnp.float32))
        _, hs = jax.lax.scan(step, init, xs)
        return hs[::-1] if reverse else hs

    hf = run_dir(params["wih_f"], params["whh_f"], params["b_f"][0], False)
    hb = run_dir(params["wih_b"], params["whh_b"], params["b_b"][0], True)
    hcat = jnp.concatenate([hf, hb], axis=-1)                 # (T, B, 2H)
    y = hcat @ params["wfc"] + params["bfc"][0]               # (T, B, F)
    return jnp.transpose(y, (1, 0, 2))                        # (B, T, F)


if __name__ == "__main__":
    B, C, W = 2, 16, 8      # batch, in_channels, sequence length (spatial W)
    HIDDEN = 32             # rnn_hidden_size (kwargs['hidden_size'])

    key = jax.random.PRNGKey(0)
    kx, kp = jax.random.split(key)
    x = jax.random.normal(kx, (B, C, 1, W), dtype=jnp.float32)
    params = init_params(kp, C, HIDDEN)

    out = jax.block_until_ready(sequence_decoder(x, params))
    ref = jax.block_until_ready(reference(x, params))

    assert out.shape == (B, W, 4 * HIDDEN), out.shape
    assert jnp.allclose(out, ref, atol=1e-3, rtol=1e-3), float(
        jnp.max(jnp.abs(out - ref)))

    print("KERNEL_OK")
</pallas_src>

<mosaic_0001>
module attributes {stable_mosaic.version = 11 : i64} {
  func.func @_decoder_kernel(%arg0: memref<64x32xf32, #tpu.memory_space<vmem>>, %arg1: memref<32x256xf32, #tpu.memory_space<vmem>>, %arg2: memref<64x256xf32, #tpu.memory_space<vmem>>, %arg3: memref<1x256xf32, #tpu.memory_space<vmem>>, %arg4: memref<64x128xf32, #tpu.memory_space<vmem>>, %arg5: memref<1x128xf32, #tpu.memory_space<vmem>>, %arg6: memref<64x128xf32, #tpu.memory_space<vmem>>, %arg7: memref<64x256xf32, #tpu.memory_space<vmem>>, %arg8: memref<64x64xf32, #tpu.memory_space<vmem>>) attributes {dimension_semantics = [], scalar_prefetch = 0 : i64, scratch_operands = 2 : i64, tpu.core_type = #tpu.core_type<tc>} {
    %c0 = arith.constant 0 : index
    %c0_0 = arith.constant 0 : index
    %0 = vector.load %arg0[%c0, %c0_0] : memref<64x32xf32, #tpu.memory_space<vmem>>, vector<64x32xf32>
    %c0_1 = arith.constant 0 : index
    %c0_2 = arith.constant 0 : index
    %1 = vector.load %arg1[%c0_1, %c0_2] : memref<32x256xf32, #tpu.memory_space<vmem>>, vector<32x256xf32>
    %cst = arith.constant dense<0.000000e+00> : vector<64x256xf32>
    %2 = tpu.matmul %0, %1, %cst {dimension_numbers = #tpu.dot_dimension_numbers<[1], [0], [0], [1], [0, 0, 1, 1], [], []>} : vector<64x32xf32>, vector<32x256xf32>, vector<64x256xf32> -> vector<64x256xf32>
    %c0_3 = arith.constant 0 : index
    %c0_4 = arith.constant 0 : index
    %3 = vector.load %arg3[%c0_3, %c0_4] : memref<1x256xf32, #tpu.memory_space<vmem>>, vector<1x256xf32>
    %4 = vector.broadcast %3 : vector<1x256xf32> to vector<64x256xf32>
    %5 = arith.addf %2, %4 : vector<64x256xf32>
    %c0_5 = arith.constant 0 : index
    %c0_6 = arith.constant 0 : index
    %6 = vector.load %arg7[%c0_5, %c0_6] : memref<64x256xf32, #tpu.memory_space<vmem>>, vector<64x256xf32>
    tpu.vector_store %arg7[%c0_5, %c0_6], %5 {strides = array<i32>} : memref<64x256xf32, #tpu.memory_space<vmem>>, vector<64x256xf32>,
    %c0_7 = arith.constant 0 : index
    %c0_8 = arith.constant 0 : index
    %7 = vector.load %arg2[%c0_7, %c0_8] : memref<64x256xf32, #tpu.memory_space<vmem>>, vector<64x256xf32>
    %cst_9 = arith.constant 0.000000e+00 : f32
    %8 = vector.broadcast %cst_9 : f32 to vector<8x64xf32>
    %cst_10 = arith.constant 0.000000e+00 : f32
    %9 = vector.broadcast %cst_10 : f32 to vector<8x64xf32>
    %c0_i32 = arith.constant 0 : i32
    %c8_i32 = arith.constant 8 : i32
    %10 = arith.muli %c0_i32, %c8_i32 : i32
    %11 = tpu.assume_multiple %10, 8 : i32
    %c7_i32 = arith.constant 7 : i32
    %12 = arith.subi %c7_i32, %c0_i32 : i32
    %c8_i32_11 = arith.constant 8 : i32
    %13 = arith.muli %12, %c8_i32_11 : i32
    %14 = tpu.assume_multiple %13, 8 : i32
    %15 = arith.index_cast %11 : i32 to index
    %c0_12 = arith.constant 0 : index
    %16 = vector.load %arg7[%15, %c0_12] : memref<64x256xf32, #tpu.memory_space<vmem>>, vector<8x256xf32>
    %cst_13 = arith.constant dense<0.000000e+00> : vector<8x256xf32>
    %17 = tpu.matmul %8, %7, %cst_13 {dimension_numbers = #tpu.dot_dimension_numbers<[1], [0], [0], [1], [0, 0, 1, 1], [], []>} : vector<8x64xf32>, vector<64x256xf32>, vector<8x256xf32> -> vector<8x256xf32>
    %18 = arith.addf %16, %17 : vector<8x256xf32>
    %19 = arith.negf %18 : vector<8x256xf32>
    %20 = math.exp %19 : vector<8x256xf32>
    %cst_14 = arith.constant 1.000000e+00 : f32
    %21 = vector.broadcast %cst_14 : f32 to vector<8x256xf32>
    %22 = arith.addf %21, %20 : vector<8x256xf32>
    %23 = arith.divf %21, %22 : vector<8x256xf32>
    %24 = vector.extract_strided_slice %23 {offsets = [0, 0], sizes = [8, 64], strides = [1, 1]} : vector<8x256xf32> to vector<8x64xf32>
    %25 = vector.extract_strided_slice %23 {offsets = [0, 64], sizes = [8, 64], strides = [1, 1]} : vector<8x256xf32> to vector<8x64xf32>
    %26 = vector.extract_strided_slice %18 {offsets = [0, 128], sizes = [8, 64], strides = [1, 1]} : vector<8x256xf32> to vector<8x64xf32>
    %27 = math.tanh %26 : vector<8x64xf32>
    %28 = vector.extract_strided_slice %23 {offsets = [0, 192], sizes = [8, 64], strides = [1, 1]} : vector<8x256xf32> to vector<8x64xf32>
    %29 = arith.mulf %25, %9 : vector<8x64xf32>
    %30 = arith.mulf %24, %27 : vector<8x64xf32>
    %31 = arith.addf %29, %30 : vector<8x64xf32>
    %32 = math.tanh %31 : vector<8x64xf32>
    %33 = arith.mulf %28, %32 : vector<8x64xf32>
    %34 = vector.extract_strided_slice %33 {offsets = [0, 0], sizes = [8, 32], strides = [1, 1]} : vector<8x64xf32> to vector<8x32xf32>
    %35 = arith.index_cast %11 : i32 to index
    %c0_15 = arith.constant 0 : index
    %36 = vector.load %arg8[%35, %c0_15] : memref<64x64xf32, #tpu.memory_space<vmem>>, vector<8x32xf32>
    tpu.vector_store %arg8[%35, %c0_15], %34 {strides = array<i32>} : memref<64x64xf32, #tpu.memory_space<vmem>>, vector<8x32xf32>,
    %37 = vector.extract_strided_slice %33 {offsets = [0, 32], sizes = [8, 32], strides = [1, 1]} : vector<8x64xf32> to vector<8x32xf32>
    %38 = arith.index_cast %14 : i32 to index
    %c32 = arith.constant 32 : index
    %39 = vector.load %arg8[%38, %c32] : memref<64x64xf32, #tpu.memory_space<vmem>>, vector<8x32xf32>
    tpu.vector_store %arg8[%38, %c32], %37 {strides = array<i32>} : memref<64x64xf32, #tpu.memory_space<vmem>>, vector<8x32xf32>,
    %c1_i32 = arith.constant 1 : i32
    %c8_i32_16 = arith.constant 8 : i32
    %40 = arith.muli %c1_i32, %c8_i32_16 : i32
    %41 = tpu.assume_multiple %40, 8 : i32
    %c7_i32_17 = arith.constant 7 : i32
    %42 = arith.subi %c7_i32_17, %c1_i32 : i32
    %c8_i32_18 = arith.constant 8 : i32
    %43 = arith.muli %42, %c8_i32_18 : i32
    %44 = tpu.assume_multiple %43, 8 : i32
    %45 = arith.index_cast %41 : i32 to index
    %c0_19 = arith.constant 0 : index
    %46 = vector.load %arg7[%45, %c0_19] : memref<64x256xf32, #tpu.memory_space<vmem>>, vector<8x256xf32>
    %cst_20 = arith.constant dense<0.000000e+00> : vector<8x256xf32>
    %47 = tpu.matmul %33, %7, %cst_20 {dimension_numbers = #tpu.dot_dimension_numbers<[1], [0], [0], [1], [0, 0, 1, 1], [], []>} : vector<8x64xf32>, vector<64x256xf32>, vector<8x256xf32> -> vector<8x256xf32>
    %48 = arith.addf %46, %47 : vector<8x256xf32>
    %49 = arith.negf %48 : vector<8x256xf32>
    %50 = math.exp %49 : vector<8x256xf32>
    %cst_21 = arith.constant 1.000000e+00 : f32
    %51 = vector.broadcast %cst_21 : f32 to vector<8x256xf32>
    %52 = arith.addf %51, %50 : vector<8x256xf32>
    %53 = arith.divf %51, %52 : vector<8x256xf32>
    %54 = vector.extract_strided_slice %53 {offsets = [0, 0], sizes = [8, 64], strides = [1, 1]} : vector<8x256xf32> to vector<8x64xf32>
    %55 = vector.extract_strided_slice %53 {offsets = [0, 64], sizes = [8, 64], strides = [1, 1]} : vector<8x256xf32> to vector<8x64xf32>
    %56 = vector.extract_strided_slice %48 {offsets = [0, 128], sizes = [8, 64], strides = [1, 1]} : vector<8x256xf32> to vector<8x64xf32>
    %57 = math.tanh %56 : vector<8x64xf32>
    %58 = vector.extract_strided_slice %53 {offsets = [0, 192], sizes = [8, 64], strides = [1, 1]} : vector<8x256xf32> to vector<8x64xf32>
    %59 = arith.mulf %55, %31 : vector<8x64xf32>
    %60 = arith.mulf %54, %57 : vector<8x64xf32>
    %61 = arith.addf %59, %60 : vector<8x64xf32>
    %62 = math.tanh %61 : vector<8x64xf32>
    %63 = arith.mulf %58, %62 : vector<8x64xf32>
    %64 = vector.extract_strided_slice %63 {offsets = [0, 0], sizes = [8, 32], strides = [1, 1]} : vector<8x64xf32> to vector<8x32xf32>
    %65 = arith.index_cast %41 : i32 to index
    %c0_22 = arith.constant 0 : index
    %66 = vector.load %arg8[%65, %c0_22] : memref<64x64xf32, #tpu.memory_space<vmem>>, vector<8x32xf32>
    tpu.vector_store %arg8[%65, %c0_22], %64 {strides = array<i32>} : memref<64x64xf32, #tpu.memory_space<vmem>>, vector<8x32xf32>,
    %67 = vector.extract_strided_slice %63 {offsets = [0, 32], sizes = [8, 32], strides = [1, 1]} : vector<8x64xf32> to vector<8x32xf32>
    %68 = arith.index_cast %44 : i32 to index
    %c32_23 = arith.constant 32 : index
    %69 = vector.load %arg8[%68, %c32_23] : memref<64x64xf32, #tpu.memory_space<vmem>>, vector<8x32xf32>
    tpu.vector_store %arg8[%68, %c32_23], %67 {strides = array<i32>} : memref<64x64xf32, #tpu.memory_space<vmem>>, vector<8x32xf32>,
    %c2_i32 = arith.constant 2 : i32
    %c8_i32_24 = arith.constant 8 : i32
    %70 = arith.muli %c2_i32, %c8_i32_24 : i32
    %71 = tpu.assume_multiple %70, 8 : i32
    %c7_i32_25 = arith.constant 7 : i32
    %72 = arith.subi %c7_i32_25, %c2_i32 : i32
    %c8_i32_26 = arith.constant 8 : i32
    %73 = arith.muli %72, %c8_i32_26 : i32
    %74 = tpu.assume_multiple %73, 8 : i32
    %75 = arith.index_cast %71 : i32 to index
    %c0_27 = arith.constant 0 : index
    %76 = vector.load %arg7[%75, %c0_27] : memref<64x256xf32, #tpu.memory_space<vmem>>, vector<8x256xf32>
    %cst_28 = arith.constant dense<0.000000e+00> : vector<8x256xf32>
    %77 = tpu.matmul %63, %7, %cst_28 {dimension_numbers = #tpu.dot_dimension_numbers<[1], [0], [0], [1], [0, 0, 1, 1], [], []>} : vector<8x64xf32>, vector<64x256xf32>, vector<8x256xf32> -> vector<8x256xf32>
    %78 = arith.addf %76, %77 : vector<8x256xf32>
    %79 = arith.negf %78 : vector<8x256xf32>
    %80 = math.exp %79 : vector<8x256xf32>
    %cst_29 = arith.constant 1.000000e+00 : f32
    %81 = vector.broadcast %cst_29 : f32 to vector<8x256xf32>
    %82 = arith.addf %81, %80 : vector<8x256xf32>
    %83 = arith.divf %81, %82 : vector<8x256xf32>
    %84 = vector.extract_strided_slice %83 {offsets = [0, 0], sizes = [8, 64], strides = [1, 1]} : vector<8x256xf32> to vector<8x64xf32>
    %85 = vector.extract_strided_slice %83 {offsets = [0, 64], sizes = [8, 64], strides = [1, 1]} : vector<8x256xf32> to vector<8x64xf32>
    %86 = vector.extract_strided_slice %78 {offsets = [0, 128], sizes = [8, 64], strides = [1, 1]} : vector<8x256xf32> to vector<8x64xf32>
    %87 = math.tanh %86 : vector<8x64xf32>
    %88 = vector.extract_strided_slice %83 {offsets = [0, 192], sizes = [8, 64], strides = [1, 1]} : vector<8x256xf32> to vector<8x64xf32>
    %89 = arith.mulf %85, %61 : vector<8x64xf32>
    %90 = arith.mulf %84, %87 : vector<8x64xf32>
    %91 = arith.addf %89, %90 : vector<8x64xf32>
    %92 = math.tanh %91 : vector<8x64xf32>
    %93 = arith.mulf %88, %92 : vector<8x64xf32>
    %94 = vector.extract_strided_slice %93 {offsets = [0, 0], sizes = [8, 32], strides = [1, 1]} : vector<8x64xf32> to vector<8x32xf32>
    %95 = arith.index_cast %71 : i32 to index
    %c0_30 = arith.constant 0 : index
    %96 = vector.load %arg8[%95, %c0_30] : memref<64x64xf32, #tpu.memory_space<vmem>>, vector<8x32xf32>
    tpu.vector_store %arg8[%95, %c0_30], %94 {strides = array<i32>} : memref<64x64xf32, #tpu.memory_space<vmem>>, vector<8x32xf32>,
    %97 = vector.extract_strided_slice %93 {offsets = [0, 32], sizes = [8, 32], strides = [1, 1]} : vector<8x64xf32> to vector<8x32xf32>
    %98 = arith.index_cast %74 : i32 to index
    %c32_31 = arith.constant 32 : index
    %99 = vector.load %arg8[%98, %c32_31] : memref<64x64xf32, #tpu.memory_space<vmem>>, vector<8x32xf32>
    tpu.vector_store %arg8[%98, %c32_31], %97 {strides = array<i32>} : memref<64x64xf32, #tpu.memory_space<vmem>>, vector<8x32xf32>,
    %c3_i32 = arith.constant 3 : i32
    %c8_i32_32 = arith.constant 8 : i32
    %100 = arith.muli %c3_i32, %c8_i32_32 : i32
    %101 = tpu.assume_multiple %100, 8 : i32
    %c7_i32_33 = arith.constant 7 : i32
    %102 = arith.subi %c7_i32_33, %c3_i32 : i32
    %c8_i32_34 = arith.constant 8 : i32
    %103 = arith.muli %102, %c8_i32_34 : i32
    %104 = tpu.assume_multiple %103, 8 : i32
    %105 = arith.index_cast %101 : i32 to index
    %c0_35 = arith.constant 0 : index
    %106 = vector.load %arg7[%105, %c0_35] : memref<64x256xf32, #tpu.memory_space<vmem>>, vector<8x256xf32>
    %cst_36 = arith.constant dense<0.000000e+00> : vector<8x256xf32>
    %107 = tpu.matmul %93, %7, %cst_36 {dimension_numbers = #tpu.dot_dimension_numbers<[1], [0], [0], [1], [0, 0, 1, 1], [], []>} : vector<8x64xf32>, vector<64x256xf32>, vector<8x256xf32> -> vector<8x256xf32>
    %108 = arith.addf %106, %107 : vector<8x256xf32>
    %109 = arith.negf %108 : vector<8x256xf32>
    %110 = math.exp %109 : vector<8x256xf32>
    %cst_37 = arith.constant 1.000000e+00 : f32
    %111 = vector.broadcast %cst_37 : f32 to vector<8x256xf32>
    %112 = arith.addf %111, %110 : vector<8x256xf32>
    %113 = arith.divf %111, %112 : vector<8x256xf32>
    %114 = vector.extract_strided_slice %113 {offsets = [0, 0], sizes = [8, 64], strides = [1, 1]} : vector<8x256xf32> to vector<8x64xf32>
    %115 = vector.extract_strided_slice %113 {offsets = [0, 64], sizes = [8, 64], strides = [1, 1]} : vector<8x256xf32> to vector<8x64xf32>
    %116 = vector.extract_strided_slice %108 {offsets = [0, 128], sizes = [8, 64], strides = [1, 1]} : vector<8x256xf32> to vector<8x64xf32>
    %117 = math.tanh %116 : vector<8x64xf32>
    %118 = vector.extract_strided_slice %113 {offsets = [0, 192], sizes = [8, 64], strides = [1, 1]} : vector<8x256xf32> to vector<8x64xf32>
    %119 = arith.mulf %115, %91 : vector<8x64xf32>
    %120 = arith.mulf %114, %117 : vector<8x64xf32>
    %121 = arith.addf %119, %120 : vector<8x64xf32>
    %122 = math.tanh %121 : vector<8x64xf32>
    %123 = arith.mulf %118, %122 : vector<8x64xf32>
    %124 = vector.extract_strided_slice %123 {offsets = [0, 0], sizes = [8, 32], strides = [1, 1]} : vector<8x64xf32> to vector<8x32xf32>
    %125 = arith.index_cast %101 : i32 to index
    %c0_38 = arith.constant 0 : index
    %126 = vector.load %arg8[%125, %c0_38] : memref<64x64xf32, #tpu.memory_space<vmem>>, vector<8x32xf32>
    tpu.vector_store %arg8[%125, %c0_38], %124 {strides = array<i32>} : memref<64x64xf32, #tpu.memory_space<vmem>>, vector<8x32xf32>,
    %127 = vector.extract_strided_slice %123 {offsets = [0, 32], sizes = [8, 32], strides = [1, 1]} : vector<8x64xf32> to vector<8x32xf32>
    %128 = arith.index_cast %104 : i32 to index
    %c32_39 = arith.constant 32 : index
    %129 = vector.load %arg8[%128, %c32_39] : memref<64x64xf32, #tpu.memory_space<vmem>>, vector<8x32xf32>
    tpu.vector_store %arg8[%128, %c32_39], %127 {strides = array<i32>} : memref<64x64xf32, #tpu.memory_space<vmem>>, vector<8x32xf32>,
    %c4_i32 = arith.constant 4 : i32
    %c8_i32_40 = arith.constant 8 : i32
    %130 = arith.muli %c4_i32, %c8_i32_40 : i32
    %131 = tpu.assume_multiple %130, 8 : i32
    %c7_i32_41 = arith.constant 7 : i32
    %132 = arith.subi %c7_i32_41, %c4_i32 : i32
    %c8_i32_42 = arith.constant 8 : i32
    %133 = arith.muli %132, %c8_i32_42 : i32
    %134 = tpu.assume_multiple %133, 8 : i32
    %135 = arith.index_cast %131 : i32 to index
    %c0_43 = arith.constant 0 : index
    %136 = vector.load %arg7[%135, %c0_43] : memref<64x256xf32, #tpu.memory_space<vmem>>, vector<8x256xf32>
    %cst_44 = arith.constant dense<0.000000e+00> : vector<8x256xf32>
    %137 = tpu.matmul %123, %7, %cst_44 {dimension_numbers = #tpu.dot_dimension_numbers<[1], [0], [0], [1], [0, 0, 1, 1], [], []>} : vector<8x64xf32>, vector<64x256xf32>, vector<8x256xf32> -> vector<8x256xf32>
    %138 = arith.addf %136, %137 : vector<8x256xf32>
    %139 = arith.negf %138 : vector<8x256xf32>
    %140 = math.exp %139 : vector<8x256xf32>
    %cst_45 = arith.constant 1.000000e+00 : f32
    %141 = vector.broadcast %cst_45 : f32 to vector<8x256xf32>
    %142 = arith.addf %141, %140 : vector<8x256xf32>
    %143 = arith.divf %141, %142 : vector<8x256xf32>
    %144 = vector.extract_strided_slice %143 {offsets = [0, 0], sizes = [8, 64], strides = [1, 1]} : vector<8x256xf32> to vector<8x64xf32>
    %145 = vector.extract_strided_slice %143 {offsets = [0, 64], sizes = [8, 64], strides = [1, 1]} : vector<8x256xf32> to vector<8x64xf32>
    %146 = vector.extract_strided_slice %138 {offsets = [0, 128], sizes = [8, 64], strides = [1, 1]} : vector<8x256xf32> to vector<8x64xf32>
    %147 = math.tanh %146 : vector<8x64xf32>
    %148 = vector.extract_strided_slice %143 {offsets = [0, 192], sizes = [8, 64], strides = [1, 1]} : vector<8x256xf32> to vector<8x64xf32>
    %149 = arith.mulf %145, %121 : vector<8x64xf32>
    %150 = arith.mulf %144, %147 : vector<8x64xf32>
    %151 = arith.addf %149, %150 : vector<8x64xf32>
    %152 = math.tanh %151 : vector<8x64xf32>
    %153 = arith.mulf %148, %152 : vector<8x64xf32>
    %154 = vector.extract_strided_slice %153 {offsets = [0, 0], sizes = [8, 32], strides = [1, 1]} : vector<8x64xf32> to vector<8x32xf32>
    %155 = arith.index_cast %131 : i32 to index
    %c0_46 = arith.constant 0 : index
    %156 = vector.load %arg8[%155, %c0_46] : memref<64x64xf32, #tpu.memory_space<vmem>>, vector<8x32xf32>
    tpu.vector_store %arg8[%155, %c0_46], %154 {strides = array<i32>} : memref<64x64xf32, #tpu.memory_space<vmem>>, vector<8x32xf32>,
    %157 = vector.extract_strided_slice %153 {offsets = [0, 32], sizes = [8, 32], strides = [1, 1]} : vector<8x64xf32> to vector<8x32xf32>
    %158 = arith.index_cast %134 : i32 to index
    %c32_47 = arith.constant 32 : index
    %159 = vector.load %arg8[%158, %c32_47] : memref<64x64xf32, #tpu.memory_space<vmem>>, vector<8x32xf32>
    tpu.vector_store %arg8[%158, %c32_47], %157 {strides = array<i32>} : memref<64x64xf32, #tpu.memory_space<vmem>>, vector<8x32xf32>,
    %c5_i32 = arith.constant 5 : i32
    %c8_i32_48 = arith.constant 8 : i32
    %160 = arith.muli %c5_i32, %c8_i32_48 : i32
    %161 = tpu.assume_multiple %160, 8 : i32
    %c7_i32_49 = arith.constant 7 : i32
    %162 = arith.subi %c7_i32_49, %c5_i32 : i32
    %c8_i32_50 = arith.constant 8 : i32
    %163 = arith.muli %162, %c8_i32_50 : i32
    %164 = tpu.assume_multiple %163, 8 : i32
    %165 = arith.index_cast %161 : i32 to index
    %c0_51 = arith.constant 0 : index
    %166 = vector.load %arg7[%165, %c0_51] : memref<64x256xf32, #tpu.memory_space<vmem>>, vector<8x256xf32>
    %cst_52 = arith.constant dense<0.000000e+00> : vector<8x256xf32>
    %167 = tpu.matmul %153, %7, %cst_52 {dimension_numbers = #tpu.dot_dimension_numbers<[1], [0], [0], [1], [0, 0, 1, 1], [], []>} : vector<8x64xf32>, vector<64x256xf32>, vector<8x256xf32> -> vector<8x256xf32>
    %168 = arith.addf %166, %167 : vector<8x256xf32>
    %169 = arith.negf %168 : vector<8x256xf32>
    %170 = math.exp %169 : vector<8x256xf32>
    %cst_53 = arith.constant 1.000000e+00 : f32
    %171 = vector.broadcast %cst_53 : f32 to vector<8x256xf32>
    %172 = arith.addf %171, %170 : vector<8x256xf32>
    %173 = arith.divf %171, %172 : vector<8x256xf32>
    %174 = vector.extract_strided_slice %173 {offsets = [0, 0], sizes = [8, 64], strides = [1, 1]} : vector<8x256xf32> to vector<8x64xf32>
    %175 = vector.extract_strided_slice %173 {offsets = [0, 64], sizes = [8, 64], strides = [1, 1]} : vector<8x256xf32> to vector<8x64xf32>
    %176 = vector.extract_strided_slice %168 {offsets = [0, 128], sizes = [8, 64], strides = [1, 1]} : vector<8x256xf32> to vector<8x64xf32>
    %177 = math.tanh %176 : vector<8x64xf32>
    %178 = vector.extract_strided_slice %173 {offsets = [0, 192], sizes = [8, 64], strides = [1, 1]} : vector<8x256xf32> to vector<8x64xf32>
    %179 = arith.mulf %175, %151 : vector<8x64xf32>
    %180 = arith.mulf %174, %177 : vector<8x64xf32>
    %181 = arith.addf %179, %180 : vector<8x64xf32>
    %182 = math.tanh %181 : vector<8x64xf32>
    %183 = arith.mulf %178, %182 : vector<8x64xf32>
    %184 = vector.extract_strided_slice %183 {offsets = [0, 0], sizes = [8, 32], strides = [1, 1]} : vector<8x64xf32> to vector<8x32xf32>
    %185 = arith.index_cast %161 : i32 to index
    %c0_54 = arith.constant 0 : index
    %186 = vector.load %arg8[%185, %c0_54] : memref<64x64xf32, #tpu.memory_space<vmem>>, vector<8x32xf32>
    tpu.vector_store %arg8[%185, %c0_54], %184 {strides = array<i32>} : memref<64x64xf32, #tpu.memory_space<vmem>>, vector<8x32xf32>,
    %187 = vector.extract_strided_slice %183 {offsets = [0, 32], sizes = [8, 32], strides = [1, 1]} : vector<8x64xf32> to vector<8x32xf32>
    %188 = arith.index_cast %164 : i32 to index
    %c32_55 = arith.constant 32 : index
    %189 = vector.load %arg8[%188, %c32_55] : memref<64x64xf32, #tpu.memory_space<vmem>>, vector<8x32xf32>
    tpu.vector_store %arg8[%188, %c32_55], %187 {strides = array<i32>} : memref<64x64xf32, #tpu.memory_space<vmem>>, vector<8x32xf32>,
    %c6_i32 = arith.constant 6 : i32
    %c8_i32_56 = arith.constant 8 : i32
    %190 = arith.muli %c6_i32, %c8_i32_56 : i32
    %191 = tpu.assume_multiple %190, 8 : i32
    %c7_i32_57 = arith.constant 7 : i32
    %192 = arith.subi %c7_i32_57, %c6_i32 : i32
    %c8_i32_58 = arith.constant 8 : i32
    %193 = arith.muli %192, %c8_i32_58 : i32
    %194 = tpu.assume_multiple %193, 8 : i32
    %195 = arith.index_cast %191 : i32 to index
    %c0_59 = arith.constant 0 : index
    %196 = vector.load %arg7[%195, %c0_59] : memref<64x256xf32, #tpu.memory_space<vmem>>, vector<8x256xf32>
    %cst_60 = arith.constant dense<0.000000e+00> : vector<8x256xf32>
    %197 = tpu.matmul %183, %7, %cst_60 {dimension_numbers = #tpu.dot_dimension_numbers<[1], [0], [0], [1], [0, 0, 1, 1], [], []>} : vector<8x64xf32>, vector<64x256xf32>, vector<8x256xf32> -> vector<8x256xf32>
    %198 = arith.addf %196, %197 : vector<8x256xf32>
    %199 = arith.negf %198 : vector<8x256xf32>
    %200 = math.exp %199 : vector<8x256xf32>
    %cst_61 = arith.constant 1.000000e+00 : f32
    %201 = vector.broadcast %cst_61 : f32 to vector<8x256xf32>
    %202 = arith.addf %201, %200 : vector<8x256xf32>
    %203 = arith.divf %201, %202 : vector<8x256xf32>
    %204 = vector.extract_strided_slice %203 {offsets = [0, 0], sizes = [8, 64], strides = [1, 1]} : vector<8x256xf32> to vector<8x64xf32>
    %205 = vector.extract_strided_slice %203 {offsets = [0, 64], sizes = [8, 64], strides = [1, 1]} : vector<8x256xf32> to vector<8x64xf32>
    %206 = vector.extract_strided_slice %198 {offsets = [0, 128], sizes = [8, 64], strides = [1, 1]} : vector<8x256xf32> to vector<8x64xf32>
    %207 = math.tanh %206 : vector<8x64xf32>
    %208 = vector.extract_strided_slice %203 {offsets = [0, 192], sizes = [8, 64], strides = [1, 1]} : vector<8x256xf32> to vector<8x64xf32>
    %209 = arith.mulf %205, %181 : vector<8x64xf32>
    %210 = arith.mulf %204, %207 : vector<8x64xf32>
    %211 = arith.addf %209, %210 : vector<8x64xf32>
    %212 = math.tanh %211 : vector<8x64xf32>
    %213 = arith.mulf %208, %212 : vector<8x64xf32>
    %214 = vector.extract_strided_slice %213 {offsets = [0, 0], sizes = [8, 32], strides = [1, 1]} : vector<8x64xf32> to vector<8x32xf32>
    %215 = arith.index_cast %191 : i32 to index
    %c0_62 = arith.constant 0 : index
    %216 = vector.load %arg8[%215, %c0_62] : memref<64x64xf32, #tpu.memory_space<vmem>>, vector<8x32xf32>
    tpu.vector_store %arg8[%215, %c0_62], %214 {strides = array<i32>} : memref<64x64xf32, #tpu.memory_space<vmem>>, vector<8x32xf32>,
    %217 = vector.extract_strided_slice %213 {offsets = [0, 32], sizes = [8, 32], strides = [1, 1]} : vector<8x64xf32> to vector<8x32xf32>
    %218 = arith.index_cast %194 : i32 to index
    %c32_63 = arith.constant 32 : index
    %219 = vector.load %arg8[%218, %c32_63] : memref<64x64xf32, #tpu.memory_space<vmem>>, vector<8x32xf32>
    tpu.vector_store %arg8[%218, %c32_63], %217 {strides = array<i32>} : memref<64x64xf32, #tpu.memory_space<vmem>>, vector<8x32xf32>,
    %c7_i32_64 = arith.constant 7 : i32
    %c8_i32_65 = arith.constant 8 : i32
    %220 = arith.muli %c7_i32_64, %c8_i32_65 : i32
    %221 = tpu.assume_multiple %220, 8 : i32
    %c7_i32_66 = arith.constant 7 : i32
    %222 = arith.subi %c7_i32_66, %c7_i32_64 : i32
    %c8_i32_67 = arith.constant 8 : i32
    %223 = arith.muli %222, %c8_i32_67 : i32
    %224 = tpu.assume_multiple %223, 8 : i32
    %225 = arith.index_cast %221 : i32 to index
    %c0_68 = arith.constant 0 : index
    %226 = vector.load %arg7[%225, %c0_68] : memref<64x256xf32, #tpu.memory_space<vmem>>, vector<8x256xf32>
    %cst_69 = arith.constant dense<0.000000e+00> : vector<8x256xf32>
    %227 = tpu.matmul %213, %7, %cst_69 {dimension_numbers = #tpu.dot_dimension_numbers<[1], [0], [0], [1], [0, 0, 1, 1], [], []>} : vector<8x64xf32>, vector<64x256xf32>, vector<8x256xf32> -> vector<8x256xf32>
    %228 = arith.addf %226, %227 : vector<8x256xf32>
    %229 = arith.negf %228 : vector<8x256xf32>
    %230 = math.exp %229 : vector<8x256xf32>
    %cst_70 = arith.constant 1.000000e+00 : f32
    %231 = vector.broadcast %cst_70 : f32 to vector<8x256xf32>
    %232 = arith.addf %231, %230 : vector<8x256xf32>
    %233 = arith.divf %231, %232 : vector<8x256xf32>
    %234 = vector.extract_strided_slice %233 {offsets = [0, 0], sizes = [8, 64], strides = [1, 1]} : vector<8x256xf32> to vector<8x64xf32>
    %235 = vector.extract_strided_slice %233 {offsets = [0, 64], sizes = [8, 64], strides = [1, 1]} : vector<8x256xf32> to vector<8x64xf32>
    %236 = vector.extract_strided_slice %228 {offsets = [0, 128], sizes = [8, 64], strides = [1, 1]} : vector<8x256xf32> to vector<8x64xf32>
    %237 = math.tanh %236 : vector<8x64xf32>
    %238 = vector.extract_strided_slice %233 {offsets = [0, 192], sizes = [8, 64], strides = [1, 1]} : vector<8x256xf32> to vector<8x64xf32>
    %239 = arith.mulf %235, %211 : vector<8x64xf32>
    %240 = arith.mulf %234, %237 : vector<8x64xf32>
    %241 = arith.addf %239, %240 : vector<8x64xf32>
    %242 = math.tanh %241 : vector<8x64xf32>
    %243 = arith.mulf %238, %242 : vector<8x64xf32>
    %244 = vector.extract_strided_slice %243 {offsets = [0, 0], sizes = [8, 32], strides = [1, 1]} : vector<8x64xf32> to vector<8x32xf32>
    %245 = arith.index_cast %221 : i32 to index
    %c0_71 = arith.constant 0 : index
    %246 = vector.load %arg8[%245, %c0_71] : memref<64x64xf32, #tpu.memory_space<vmem>>, vector<8x32xf32>
    tpu.vector_store %arg8[%245, %c0_71], %244 {strides = array<i32>} : memref<64x64xf32, #tpu.memory_space<vmem>>, vector<8x32xf32>,
    %247 = vector.extract_strided_slice %243 {offsets = [0, 32], sizes = [8, 32], strides = [1, 1]} : vector<8x64xf32> to vector<8x32xf32>
    %248 = arith.index_cast %224 : i32 to index
    %c32_72 = arith.constant 32 : index
    %249 = vector.load %arg8[%248, %c32_72] : memref<64x64xf32, #tpu.memory_space<vmem>>, vector<8x32xf32>
    tpu.vector_store %arg8[%248, %c32_72], %247 {strides = array<i32>} : memref<64x64xf32, #tpu.memory_space<vmem>>, vector<8x32xf32>,
    %c8_i32_73 = arith.constant 8 : i32
    %c0_74 = arith.constant 0 : index
    %c0_75 = arith.constant 0 : index
    %250 = vector.load %arg8[%c0_74, %c0_75] : memref<64x64xf32, #tpu.memory_space<vmem>>, vector<64x64xf32>
    %c0_76 = arith.constant 0 : index
    %c0_77 = arith.constant 0 : index
    %251 = vector.load %arg4[%c0_76, %c0_77] : memref<64x128xf32, #tpu.memory_space<vmem>>, vector<64x128xf32>
    %cst_78 = arith.constant dense<0.000000e+00> : vector<64x128xf32>
    %252 = tpu.matmul %250, %251, %cst_78 {dimension_numbers = #tpu.dot_dimension_numbers<[1], [0], [0], [1], [0, 0, 1, 1], [], []>} : vector<64x64xf32>, vector<64x128xf32>, vector<64x128xf32> -> vector<64x128xf32>
    %c0_79 = arith.constant 0 : index
    %c0_80 = arith.constant 0 : index
    %253 = vector.load %arg5[%c0_79, %c0_80] : memref<1x128xf32, #tpu.memory_space<vmem>>, vector<1x128xf32>
    %254 = vector.broadcast %253 : vector<1x128xf32> to vector<64x128xf32>
    %255 = arith.addf %252, %254 : vector<64x128xf32>
    %c0_81 = arith.constant 0 : index
    %c0_82 = arith.constant 0 : index
    %256 = vector.load %arg6[%c0_81, %c0_82] : memref<64x128xf32, #tpu.memory_space<vmem>>, vector<64x128xf32>
    tpu.vector_store %arg6[%c0_81, %c0_82], %255 {strides = array<i32>} : memref<64x128xf32, #tpu.memory_space<vmem>>, vector<64x128xf32>,
    return
  }
}

</mosaic_0001>

<llo_original>
// kernel: tpu_custom_call.1
$region0: #{tpu_custom_call.1}
  #allocation0 [shape = 'u32[]', space=smem, size = 0x4, offset = 0x4, fixed_abs, tag = 'smem constant byte address 0x4 - core index']
  #allocation1 [shape = 'u32[144,128]{1,0:T(1,128)}', space=vmem, size = 0x12000, scoped, tag = 'internal scratch']
  #allocation2 [shape = 'f32[64,256]{1,0:T(8,128)}', space=vmem, size = 0x10000, scoped, tag = 'scratch operand']
  #allocation3 [shape = 'f32[64,64]{1,0:T(8,128)}', space=vmem, size = 0x8000, scoped, tag = 'scratch operand']
  %s0 = inlined_call_operand.vmem [shape: f32[64,32], index: 0, kind: input, shape index: {}]
  %s1 = inlined_call_operand.vmem [shape: f32[32,256], index: 1, kind: input, shape index: {}]
  %s2 = inlined_call_operand.hbm [shape: f32[64,256], index: 2, kind: input, shape index: {}]
  %s3 = inlined_call_operand.vmem [shape: f32[1,256], index: 3, kind: input, shape index: {}]
  %s4 = inlined_call_operand.hbm [shape: f32[64,128], index: 4, kind: input, shape index: {}]
  %s5 = inlined_call_operand.vmem [shape: f32[1,128], index: 5, kind: input, shape index: {}]
  %s6 = inlined_call_operand.hbm [shape: f32[64,128], index: 6, kind: output, shape index: {}]
  %s7 = sld [smem:[#allocation0]]
  $region42: #{tpu_custom_call.1} parent=0
    _
  %s9 = ssub.s32 1, %s7
  %s10 = scalar_select 0, %s9, %s7
  $region1: #{tpu_custom_call.1} parent=0
    #allocation4 [shape = 'u8[65536]{0}', space=vmem, size = 0x10000, scoped, tag = 'input window, operand 2, single buffered']
    #allocation5 [shape = 's32[1]{0}', space=sflag, size = 0x4, scoped, tag = 'scoped memory for tpu_custom_call.1']
    #allocation6 [shape = 's32[1]{0}', space=sflag, size = 0x4, scoped, tag = 'scoped memory for tpu_custom_call.1']
    #allocation7 [shape = 'u8[32768]{0}', space=vmem, size = 0x8000, scoped, tag = 'input window, operand 4, single buffered']
    #allocation8 [shape = 's32[1]{0}', space=sflag, size = 0x4, scoped, tag = 'scoped memory for tpu_custom_call.1']
    #allocation9 [shape = 'u8[32768]{0}', space=vmem, size = 0x8000, scoped, tag = 'output window, operand 0, single buffered']
    %11 = vsyncpa [#allocation5], 0
    %12 = vsyncpa [#allocation8], 0
    %13 = vsyncpa [#allocation6], 0
    // Predicated region
    $region2: #{tpu_custom_call.1} parent=1 // pred_check
      _
    $region3: #{tpu_custom_call.1} parent=1 // pred_check_branch
      %15 = sbr.rel (0) target = $region5
    $region4: #{tpu_custom_call.1} parent=1 // pred_region
      _
    $region5: #{tpu_custom_call.1} parent=1 // pred_fallthru
      _
    // Predicated region
    $region6: #{tpu_custom_call.1} parent=1 // pred_check
      _
    $region7: #{tpu_custom_call.1} parent=1 // pred_check_branch
      %17 = sbr.rel (0) target = $region9
    $region8: #{tpu_custom_call.1} parent=1 // pred_region
      _
    $region9: #{tpu_custom_call.1} parent=1 // pred_fallthru
      _
    // Predicated region
    $region10: #{tpu_custom_call.1} parent=1 // pred_check
      _
    $region11: #{tpu_custom_call.1} parent=1 // pred_check_branch
      %19 = sbr.rel (0) target = $region13
    $region12: #{tpu_custom_call.1} parent=1 // pred_region
      %s21 = ssub.s32 2048, 2048
      %22 = vsyncadd [#allocation5], %s21
      %s23 = sshll.u32 [#allocation4], 4
      %s24 = int_to_ptr.vmem [resolvable:$true] %s23
      %29 = dma.hbm_to_vmem [thread:$0]  %s2, 2048, %s24, [#allocation5], 256, 256, 16
    $region13: #{tpu_custom_call.1} parent=1 // pred_fallthru
      _
    // Predicated region
    $region14: #{tpu_custom_call.1} parent=1 // pred_check
      _
    $region15: #{tpu_custom_call.1} parent=1 // pred_check_branch
      %31 = sbr.rel (0) target = $region17
    $region16: #{tpu_custom_call.1} parent=1 // pred_region
      _
    $region17: #{tpu_custom_call.1} parent=1 // pred_fallthru
      _
    // Predicated region
    $region18: #{tpu_custom_call.1} parent=1 // pred_check
      _
    $region19: #{tpu_custom_call.1} parent=1 // pred_check_branch
      %33 = sbr.rel (0) target = $region21
    $region20: #{tpu_custom_call.1} parent=1 // pred_region
      %s35 = ssub.s32 1024, 1024
      %36 = vsyncadd [#allocation8], %s35
      %s37 = sshll.u32 [#allocation7], 4
      %s38 = int_to_ptr.vmem [resolvable:$true] %s37
      %43 = dma.hbm_to_vmem [thread:$0]  %s4, 1024, %s38, [#allocation8], 128, 128, 8
    $region21: #{tpu_custom_call.1} parent=1 // pred_fallthru
      _
    // Predicated region
    $region22: #{tpu_custom_call.1} parent=1 // pred_check
      _
    $region23: #{tpu_custom_call.1} parent=1 // pred_check_branch
      %45 = sbr.rel (0) target = $region25
    $region24: #{tpu_custom_call.1} parent=1 // pred_region
      _
    $region25: #{tpu_custom_call.1} parent=1 // pred_fallthru
      _
    // Predicated region
    $region26: #{tpu_custom_call.1} parent=1 // pred_check
      _
    $region27: #{tpu_custom_call.1} parent=1 // pred_check_branch
      %47 = sbr.rel (0) target = $region29
    $region28: #{tpu_custom_call.1} parent=1 // pred_region
      %48 = dma.done [#allocation5], 2048
    $region29: #{tpu_custom_call.1} parent=1 // pred_fallthru
      _
    // Predicated region
    $region30: #{tpu_custom_call.1} parent=1 // pred_check
      _
    $region31: #{tpu_custom_call.1} parent=1 // pred_check_branch
      %50 = sbr.rel (0) target = $region33
    $region32: #{tpu_custom_call.1} parent=1 // pred_region
      %51 = dma.done [#allocation8], 1024
    $region33: #{tpu_custom_call.1} parent=1 // pred_fallthru
      _
    %v52 = vld [vmem:[%s0] sm:$0xff]
    %v53 = vld [vmem:[%s0 + $0x8] sm:$0xff]
    %v54 = vld [vmem:[%s0 + $0x10] sm:$0xff]
    %v55 = vld [vmem:[%s0 + $0x18] sm:$0xff]
    %v56 = vld [vmem:[%s0 + $0x20] sm:$0xff]
    %v57 = vld [vmem:[%s0 + $0x28] sm:$0xff]
    %v58 = vld [vmem:[%s0 + $0x30] sm:$0xff]
    %v59 = vld [vmem:[%s0 + $0x38] sm:$0xff]
    %v60 = vld [vmem:[%s1] sm:$0xff]
    %v61 = vld [vmem:[%s1 + $0x8] sm:$0xff]
    %v62 = vld [vmem:[%s1 + $0x10] sm:$0xff]
    %v63 = vld [vmem:[%s1 + $0x18] sm:$0xff]
    %v64 = vld [vmem:[%s1 + $0x20] sm:$0xff]
    %v65 = vld [vmem:[%s1 + $0x28] sm:$0xff]
    %v66 = vld [vmem:[%s1 + $0x30] sm:$0xff]
    %v67 = vld [vmem:[%s1 + $0x38] sm:$0xff]
    %v68 = vld [vmem:[%s3] sm:$0x3]
    %v70 = vlaneseq
    %v71 = vshrl.u32 %v70, 7
    %v72 = vsub.s32 0, %v71
    %v73 = vrot.slane %v68, %v72
    %v74 = vlaneseq
    %v75 = vshrl.u32 %v74, 7
    %v76 = vsub.s32 1, %v75
    %v77 = vrot.slane %v68, %v76
    %vm80 = vcmask 261120
    %v82 = vsel %vm80, %v52, 0
    %v85 = vsel %vm80, %v53, 0
    %v88 = vsel %vm80, %v54, 0
    %v91 = vsel %vm80, %v55, 0
    %v94 = vsel %vm80, %v56, 0
    %v97 = vsel %vm80, %v57, 0
    %v100 = vsel %vm80, %v58, 0
    %v103 = vsel %vm80, %v59, 0
    %105 = vmatprep.subr.mxu0 0.0
    %106 = vmatpush1.msra.mxu0 0.0
    %107 = vmatprep.subr.mxu0 0.0
    %108 = vmatpush1.msra.mxu0 0.0
    %109 = vmatprep.subr.mxu0 0.0
    %110 = vmatpush1.msra.mxu0 0.0
    %111 = vmatprep.subr.mxu0 0.0
    %112 = vmatpush1.msra.mxu0 0.0
    %113 = vmatprep.subr.mxu0 0.0
    %114 = vmatpush1.msra.mxu0 0.0
    %115 = vmatprep.subr.mxu0 0.0
    %116 = vmatpush1.msra.mxu0 0.0
    %117 = vmatprep.subr.mxu0 0.0
    %118 = vmatpush1.msra.mxu0 0.0
    %119 = vmatprep.subr.mxu0 0.0
    %120 = vmatpush1.msra.mxu0 0.0
    %121 = vmatprep.subr.mxu0 0.0
    %122 = vmatpush1.msra.mxu0 0.0
    %123 = vmatprep.subr.mxu0 0.0
    %124 = vmatpush1.msra.mxu0 0.0
    %125 = vmatprep.subr.mxu0 0.0
    %126 = vmatpush1.msra.mxu0 0.0
    %127 = vmatprep.subr.mxu0 0.0
    %128 = vmatpush1.msra.mxu0 0.0
    %129 = vmatprep.subr.mxu0 %v67
    %130 = vmatpush1.msra.mxu0 %v66
    %131 = vmatprep.subr.mxu0 %v65
    %132 = vmatpush1.msra.mxu0 %v64
    %133 = vmatprep.subr.mxu0 %v63
    %134 = vmatpush1.msra.mxu0 %v62
    %135 = vmatprep.subr.mxu0 %v61
    %136 = vmatpush1.msra.mxu0 %v60
    %137 = vmatprep.subr.mxu0 0.0
    %138 = vmatpush2.msra.mxu0 0.0
    %139 = vmatprep.subr.mxu0 0.0
    %140 = vmatpush2.msra.mxu0 0.0
    %141 = vmatprep.subr.mxu0 0.0
    %142 = vmatpush2.msra.mxu0 0.0
    %143 = vmatprep.subr.mxu0 0.0
    %144 = vmatpush2.msra.mxu0 0.0
    %145 = vmatprep.subr.mxu0 0.0
    %146 = vmatpush2.msra.mxu0 0.0
    %147 = vmatprep.subr.mxu0 0.0
    %148 = vmatpush2.msra.mxu0 0.0
    %149 = vmatprep.subr.mxu0 0.0
    %150 = vmatpush2.msra.mxu0 0.0
    %151 = vmatprep.subr.mxu0 0.0
    %152 = vmatpush2.msra.mxu0 0.0
    %153 = vmatprep.subr.mxu0 0.0
    %154 = vmatpush2.msra.mxu0 0.0
    %155 = vmatprep.subr.mxu0 0.0
    %156 = vmatpush2.msra.mxu0 0.0
    %157 = vmatprep.subr.mxu0 0.0
    %158 = vmatpush2.msra.mxu0 0.0
    %159 = vmatprep.subr.mxu0 0.0
    %160 = vmatpush2.msra.mxu0 0.0
    %161 = vmatprep.subr.mxu0 0.0
    %162 = vmatpush2.msra.mxu0 0.0
    %163 = vmatprep.subr.mxu0 0.0
    %164 = vmatpush2.msra.mxu0 0.0
    %165 = vmatprep.subr.mxu0 0.0
    %166 = vmatpush2.msra.mxu0 0.0
    %167 = vmatprep.subr.mxu0 0.0
    %168 = vmatpush2.msra.mxu0 0.0
    %169 = vmatprep.mubr.f32.mxu0 0.0
    %170 = vmatmul.mubr.f32.gmra.mxu0 %v82
    %v171 = vpop.f32.mrf.mxu0
    %v172 = vadd.f32 %v73, %v171
    %v173 = vpop.f32.mrf.mxu0
    %v174 = vadd.f32 %v77, %v173
    %175 = vmatprep.mubr.f32.mxu0 0.0
    %176 = vmatmul.mubr.f32.gmra.mxu0 %v85
    %v177 = vpop.f32.mrf.mxu0
    %v178 = vadd.f32 %v73, %v177
    %v179 = vpop.f32.mrf.mxu0
    %v180 = vadd.f32 %v77, %v179
    %181 = vmatprep.mubr.f32.mxu0 0.0
    %182 = vmatmul.mubr.f32.gmra.mxu0 %v88
    %v183 = vpop.f32.mrf.mxu0
    %v184 = vadd.f32 %v73, %v183
    %v185 = vpop.f32.mrf.mxu0
    %v186 = vadd.f32 %v77, %v185
    %187 = vmatprep.mubr.f32.mxu0 0.0
    %188 = vmatmul.mubr.f32.gmra.mxu0 %v91
    %v189 = vpop.f32.mrf.mxu0
    %v190 = vadd.f32 %v73, %v189
    %v191 = vpop.f32.mrf.mxu0
    %v192 = vadd.f32 %v77, %v191
    %193 = vmatprep.mubr.f32.mxu0 0.0
    %194 = vmatmul.mubr.f32.gmra.mxu0 %v94
    %v195 = vpop.f32.mrf.mxu0
    %v196 = vadd.f32 %v73, %v195
    %v197 = vpop.f32.mrf.mxu0
    %v198 = vadd.f32 %v77, %v197
    %199 = vmatprep.mubr.f32.mxu0 0.0
    %200 = vmatmul.mubr.f32.gmra.mxu0 %v97
    %v201 = vpop.f32.mrf.mxu0
    %v202 = vadd.f32 %v73, %v201
    %v203 = vpop.f32.mrf.mxu0
    %v204 = vadd.f32 %v77, %v203
    %205 = vmatprep.mubr.f32.mxu0 0.0
    %206 = vmatmul.mubr.f32.gmra.mxu0 %v100
    %v207 = vpop.f32.mrf.mxu0
    %v208 = vadd.f32 %v73, %v207
    %v209 = vpop.f32.mrf.mxu0
    %v210 = vadd.f32 %v77, %v209
    %211 = vmatprep.mubr.f32.mxu0 0.0
    %212 = vmatmul.mubr.f32.gmra.mxu0 %v103
    %v213 = vpop.f32.mrf.mxu0
    %v214 = vadd.f32 %v73, %v213
    %v215 = vpop.f32.mrf.mxu0
    %v216 = vadd.f32 %v77, %v215
    %217 = vdwg.mxu0
    %218 = vst [vmem:[#allocation2] sm:$0xff] %v172
    %219 = vst [vmem:[#allocation2 + $0x8] sm:$0xff] %v174
    %220 = vst [vmem:[#allocation2 + $0x10] sm:$0xff] %v178
    %221 = vst [vmem:[#allocation2 + $0x18] sm:$0xff] %v180
    %222 = vst [vmem:[#allocation2 + $0x20] sm:$0xff] %v184
    %223 = vst [vmem:[#allocation2 + $0x28] sm:$0xff] %v186
    %224 = vst [vmem:[#allocation2 + $0x30] sm:$0xff] %v190
    %225 = vst [vmem:[#allocation2 + $0x38] sm:$0xff] %v192
    %226 = vst [vmem:[#allocation2 + $0x40] sm:$0xff] %v196
    %227 = vst [vmem:[#allocation2 + $0x48] sm:$0xff] %v198
    %228 = vst [vmem:[#allocation2 + $0x50] sm:$0xff] %v202
    %229 = vst [vmem:[#allocation2 + $0x58] sm:$0xff] %v204
    %230 = vst [vmem:[#allocation2 + $0x60] sm:$0xff] %v208
    %231 = vst [vmem:[#allocation2 + $0x68] sm:$0xff] %v210
    %232 = vst [vmem:[#allocation2 + $0x70] sm:$0xff] %v214
    %233 = vst [vmem:[#allocation2 + $0x78] sm:$0xff] %v216
    %v234 = vld [vmem:[#allocation4] sm:$0xff]
    %v235 = vld [vmem:[#allocation4 + $0x8] sm:$0xff]
    %v236 = vld [vmem:[#allocation4 + $0x10] sm:$0xff]
    %v237 = vld [vmem:[#allocation4 + $0x18] sm:$0xff]
    %v238 = vld [vmem:[#allocation4 + $0x20] sm:$0xff]
    %v239 = vld [vmem:[#allocation4 + $0x28] sm:$0xff]
    %v240 = vld [vmem:[#allocation4 + $0x30] sm:$0xff]
    %v241 = vld [vmem:[#allocation4 + $0x38] sm:$0xff]
    %v242 = vld [vmem:[#allocation4 + $0x40] sm:$0xff]
    %v243 = vld [vmem:[#allocation4 + $0x48] sm:$0xff]
    %v244 = vld [vmem:[#allocation4 + $0x50] sm:$0xff]
    %v245 = vld [vmem:[#allocation4 + $0x58] sm:$0xff]
    %v246 = vld [vmem:[#allocation4 + $0x60] sm:$0xff]
    %v247 = vld [vmem:[#allocation4 + $0x68] sm:$0xff]
    %v248 = vld [vmem:[#allocation4 + $0x70] sm:$0xff]
    %v249 = vld [vmem:[#allocation4 + $0x78] sm:$0xff]
    %s250 = smul.u32 0, 2
    %s251 = smul.addr %s250, 8
    %s252 = scalar_lea.vmem [#allocation2], %s251
    %v253 = vld [vmem:[%s252] sm:$0xff]
    %v254 = vld [vmem:[%s252 + $0x8] sm:$0xff]
    %vm255 = vcmask 523264
    %v257 = vsel %vm255, 0.0, 0
    %259 = vmatprep.subr.mxu0 0.0
    %260 = vmatpush1.msra.mxu0 0.0
    %261 = vmatprep.subr.mxu0 0.0
    %262 = vmatpush1.msra.mxu0 0.0
    %263 = vmatprep.subr.mxu0 0.0
    %264 = vmatpush1.msra.mxu0 0.0
    %265 = vmatprep.subr.mxu0 0.0
    %266 = vmatpush1.msra.mxu0 0.0
    %267 = vmatprep.subr.mxu0 0.0
    %268 = vmatpush1.msra.mxu0 0.0
    %269 = vmatprep.subr.mxu0 0.0
    %270 = vmatpush1.msra.mxu0 0.0
    %271 = vmatprep.subr.mxu0 0.0
    %272 = vmatpush1.msra.mxu0 0.0
    %273 = vmatprep.subr.mxu0 0.0
    %274 = vmatpush1.msra.mxu0 0.0
    %275 = vmatprep.subr.mxu0 %v249
    %276 = vmatpush1.msra.mxu0 %v248
    %277 = vmatprep.subr.mxu0 %v247
    %278 = vmatpush1.msra.mxu0 %v246
    %279 = vmatprep.subr.mxu0 %v245
    %280 = vmatpush1.msra.mxu0 %v244
    %281 = vmatprep.subr.mxu0 %v243
    %282 = vmatpush1.msra.mxu0 %v242
    %283 = vmatprep.subr.mxu0 %v241
    %284 = vmatpush1.msra.mxu0 %v240
    %285 = vmatprep.subr.mxu0 %v239
    %286 = vmatpush1.msra.mxu0 %v238
    %287 = vmatprep.subr.mxu0 %v237
    %288 = vmatpush1.msra.mxu0 %v236
    %289 = vmatprep.subr.mxu0 %v235
    %290 = vmatpush1.msra.mxu0 %v234
    %291 = vmatprep.subr.mxu0 0.0
    %292 = vmatpush2.msra.mxu0 0.0
    %293 = vmatprep.subr.mxu0 0.0
    %294 = vmatpush2.msra.mxu0 0.0
    %295 = vmatprep.subr.mxu0 0.0
    %296 = vmatpush2.msra.mxu0 0.0
    %297 = vmatprep.subr.mxu0 0.0
    %298 = vmatpush2.msra.mxu0 0.0
    %299 = vmatprep.subr.mxu0 0.0
    %300 = vmatpush2.msra.mxu0 0.0
    %301 = vmatprep.subr.mxu0 0.0
    %302 = vmatpush2.msra.mxu0 0.0
    %303 = vmatprep.subr.mxu0 0.0
    %304 = vmatpush2.msra.mxu0 0.0
    %305 = vmatprep.subr.mxu0 0.0
    %306 = vmatpush2.msra.mxu0 0.0
    %307 = vmatprep.subr.mxu0 0.0
    %308 = vmatpush2.msra.mxu0 0.0
    %309 = vmatprep.subr.mxu0 0.0
    %310 = vmatpush2.msra.mxu0 0.0
    %311 = vmatprep.subr.mxu0 0.0
    %312 = vmatpush2.msra.mxu0 0.0
    %313 = vmatprep.subr.mxu0 0.0
    %314 = vmatpush2.msra.mxu0 0.0
    %315 = vmatprep.subr.mxu0 0.0
    %316 = vmatpush2.msra.mxu0 0.0
    %317 = vmatprep.subr.mxu0 0.0
    %318 = vmatpush2.msra.mxu0 0.0
    %319 = vmatprep.subr.mxu0 0.0
    %320 = vmatpush2.msra.mxu0 0.0
    %321 = vmatprep.subr.mxu0 0.0
    %322 = vmatpush2.msra.mxu0 0.0
    %323 = vmatprep.mubr.f32.mxu0 0.0
    %324 = vmatmul.mubr.f32.gmra.mxu0 %v257
    %v325 = vpop.f32.mrf.mxu0
    %v326 = vadd.f32 0.0, %v325
    %v327 = vpop.f32.mrf.mxu0
    %v328 = vadd.f32 0.0, %v327
    %329 = vdwg.mxu0
    %v330 = vadd.f32 %v253, %v326
    %v331 = vadd.f32 %v254, %v328
    %v332 = vxor.u32 %v330, 2147483648
    %v333 = vxor.u32 %v331, 2147483648
    %v334 = vmul.f32 %v332, 1.442695
    %v335 = vpow.pop %v334
    %v336 = vmul.f32 %v333, 1.442695
    %v337 = vpow.pop %v336
    %v338 = vadd.f32 %v335, 1.0
    %v339 = vadd.f32 %v337, 1.0
    %v340 = vrcp.pop %v338
    %v341 = vmul.f32 1.0, %v340
    %v342 = vrcp.pop %v339
    %v343 = vmul.f32 1.0, %v342
    %v344 = vtanh.pop %v331
    %v345 = vmul.f32 %v341, 0.0
    %v346 = vmul.f32 %v341, %v344
    %348 = vrot.lane.b32.xlu0 %v346, 64
    %v349 = vpop.permute.xlu0 %348
    %v351 = vadd.f32 %v345, %v349
    %v352 = vtanh.pop %v351
    %v353 = vmul.f32 %v343, %v352
    %355 = vrot.lane.b32.xlu0 %v353, 64
    %v356 = vpop.permute.xlu0 %355
    %358 = vst.msk [vmem:[#allocation3] sm:$0xff] %vm80, %v356
    %s359 = scalar_lea.vmem [#allocation3], 56
    %vm360 = vcmask 523520
    %361 = vst.msk [vmem:[%s359] sm:$0xff] %vm360, %v356
    %s362 = smul.u32 1, 2
    %s363 = smul.addr %s362, 8
    %s364 = scalar_lea.vmem [#allocation2], %s363
    %v365 = vld [vmem:[%s364] sm:$0xff]
    %v366 = vld [vmem:[%s364 + $0x8] sm:$0xff]
    %v367 = vsel %vm255, %v356, 0
    %369 = vmatprep.subr.mxu0 0.0
    %370 = vmatpush1.msra.mxu0 0.0
    %371 = vmatprep.subr.mxu0 0.0
    %372 = vmatpush1.msra.mxu0 0.0
    %373 = vmatprep.subr.mxu0 0.0
    %374 = vmatpush1.msra.mxu0 0.0
    %375 = vmatprep.subr.mxu0 0.0
    %376 = vmatpush1.msra.mxu0 0.0
    %377 = vmatprep.subr.mxu0 0.0
    %378 = vmatpush1.msra.mxu0 0.0
    %379 = vmatprep.subr.mxu0 0.0
    %380 = vmatpush1.msra.mxu0 0.0
    %381 = vmatprep.subr.mxu0 0.0
    %382 = vmatpush1.msra.mxu0 0.0
    %383 = vmatprep.subr.mxu0 0.0
    %384 = vmatpush1.msra.mxu0 0.0
    %385 = vmatprep.subr.mxu0 %v249
    %386 = vmatpush1.msra.mxu0 %v248
    %387 = vmatprep.subr.mxu0 %v247
    %388 = vmatpush1.msra.mxu0 %v246
    %389 = vmatprep.subr.mxu0 %v245
    %390 = vmatpush1.msra.mxu0 %v244
    %391 = vmatprep.subr.mxu0 %v243
    %392 = vmatpush1.msra.mxu0 %v242
    %393 = vmatprep.subr.mxu0 %v241
    %394 = vmatpush1.msra.mxu0 %v240
    %395 = vmatprep.subr.mxu0 %v239
    %396 = vmatpush1.msra.mxu0 %v238
    %397 = vmatprep.subr.mxu0 %v237
    %398 = vmatpush1.msra.mxu0 %v236
    %399 = vmatprep.subr.mxu0 %v235
    %400 = vmatpush1.msra.mxu0 %v234
    %401 = vmatprep.subr.mxu0 0.0
    %402 = vmatpush2.msra.mxu0 0.0
    %403 = vmatprep.subr.mxu0 0.0
    %404 = vmatpush2.msra.mxu0 0.0
    %405 = vmatprep.subr.mxu0 0.0
    %406 = vmatpush2.msra.mxu0 0.0
    %407 = vmatprep.subr.mxu0 0.0
    %408 = vmatpush2.msra.mxu0 0.0
    %409 = vmatprep.subr.mxu0 0.0
    %410 = vmatpush2.msra.mxu0 0.0
    %411 = vmatprep.subr.mxu0 0.0
    %412 = vmatpush2.msra.mxu0 0.0
    %413 = vmatprep.subr.mxu0 0.0
    %414 = vmatpush2.msra.mxu0 0.0
    %415 = vmatprep.subr.mxu0 0.0
    %416 = vmatpush2.msra.mxu0 0.0
    %417 = vmatprep.subr.mxu0 0.0
    %418 = vmatpush2.msra.mxu0 0.0
    %419 = vmatprep.subr.mxu0 0.0
    %420 = vmatpush2.msra.mxu0 0.0
    %421 = vmatprep.subr.mxu0 0.0
    %422 = vmatpush2.msra.mxu0 0.0
    %423 = vmatprep.subr.mxu0 0.0
    %424 = vmatpush2.msra.mxu0 0.0
    %425 = vmatprep.subr.mxu0 0.0
    %426 = vmatpush2.msra.mxu0 0.0
    %427 = vmatprep.subr.mxu0 0.0
    %428 = vmatpush2.msra.mxu0 0.0
    %429 = vmatprep.subr.mxu0 0.0
    %430 = vmatpush2.msra.mxu0 0.0
    %431 = vmatprep.subr.mxu0 0.0
    %432 = vmatpush2.msra.mxu0 0.0
    %433 = vmatprep.mubr.f32.mxu0 0.0
    %434 = vmatmul.mubr.f32.gmra.mxu0 %v367
    %v435 = vpop.f32.mrf.mxu0
    %v436 = vadd.f32 0.0, %v435
    %v437 = vpop.f32.mrf.mxu0
    %v438 = vadd.f32 0.0, %v437
    %439 = vdwg.mxu0
    %v440 = vadd.f32 %v365, %v436
    %v441 = vadd.f32 %v366, %v438
    %v442 = vxor.u32 %v440, 2147483648
    %v443 = vxor.u32 %v441, 2147483648
    %v444 = vmul.f32 %v442, 1.442695
    %v445 = vpow.pop %v444
    %v446 = vmul.f32 %v443, 1.442695
    %v447 = vpow.pop %v446
    %v448 = vadd.f32 %v445, 1.0
    %v449 = vadd.f32 %v447, 1.0
    %v450 = vrcp.pop %v448
    %v451 = vmul.f32 1.0, %v450
    %v452 = vrcp.pop %v449
    %v453 = vmul.f32 1.0, %v452
    %v454 = vtanh.pop %v441
    %v455 = vmul.f32 %v451, %v351
    %v456 = vmul.f32 %v451, %v454
    %458 = vrot.lane.b32.xlu0 %v456, 64
    %v459 = vpop.permute.xlu0 %458
    %v461 = vadd.f32 %v455, %v459
    %v462 = vtanh.pop %v461
    %v463 = vmul.f32 %v453, %v462
    %465 = vrot.lane.b32.xlu0 %v463, 64
    %v466 = vpop.permute.xlu0 %465
    %s468 = scalar_lea.vmem [#allocation3], 8
    %469 = vst.msk [vmem:[%s468] sm:$0xff] %vm80, %v466
    %s470 = scalar_lea.vmem [#allocation3], 48
    %471 = vst.msk [vmem:[%s470] sm:$0xff] %vm360, %v466
    %s472 = smul.u32 2, 2
    %s473 = smul.addr %s472, 8
    %s474 = scalar_lea.vmem [#allocation2], %s473
    %v475 = vld [vmem:[%s474] sm:$0xff]
    %v476 = vld [vmem:[%s474 + $0x8] sm:$0xff]
    %v477 = vsel %vm255, %v466, 0
    %479 = vmatprep.subr.mxu0 0.0
    %480 = vmatpush1.msra.mxu0 0.0
    %481 = vmatprep.subr.mxu0 0.0
    %482 = vmatpush1.msra.mxu0 0.0
    %483 = vmatprep.subr.mxu0 0.0
    %484 = vmatpush1.msra.mxu0 0.0
    %485 = vmatprep.subr.mxu0 0.0
    %486 = vmatpush1.msra.mxu0 0.0
    %487 = vmatprep.subr.mxu0 0.0
    %488 = vmatpush1.msra.mxu0 0.0
    %489 = vmatprep.subr.mxu0 0.0
    %490 = vmatpush1.msra.mxu0 0.0
    %491 = vmatprep.subr.mxu0 0.0
    %492 = vmatpush1.msra.mxu0 0.0
    %493 = vmatprep.subr.mxu0 0.0
    %494 = vmatpush1.msra.mxu0 0.0
    %495 = vmatprep.subr.mxu0 %v249
    %496 = vmatpush1.msra.mxu0 %v248
    %497 = vmatprep.subr.mxu0 %v247
    %498 = vmatpush1.msra.mxu0 %v246
    %499 = vmatprep.subr.mxu0 %v245
    %500 = vmatpush1.msra.mxu0 %v244
    %501 = vmatprep.subr.mxu0 %v243
    %502 = vmatpush1.msra.mxu0 %v242
    %503 = vmatprep.subr.mxu0 %v241
    %504 = vmatpush1.msra.mxu0 %v240
    %505 = vmatprep.subr.mxu0 %v239
    %506 = vmatpush1.msra.mxu0 %v238
    %507 = vmatprep.subr.mxu0 %v237
    %508 = vmatpush1.msra.mxu0 %v236
    %509 = vmatprep.subr.mxu0 %v235
    %510 = vmatpush1.msra.mxu0 %v234
    %511 = vmatprep.subr.mxu0 0.0
    %512 = vmatpush2.msra.mxu0 0.0
    %513 = vmatprep.subr.mxu0 0.0
    %514 = vmatpush2.msra.mxu0 0.0
    %515 = vmatprep.subr.mxu0 0.0
    %516 = vmatpush2.msra.mxu0 0.0
    %517 = vmatprep.subr.mxu0 0.0
    %518 = vmatpush2.msra.mxu0 0.0
    %519 = vmatprep.subr.mxu0 0.0
    %520 = vmatpush2.msra.mxu0 0.0
    %521 = vmatprep.subr.mxu0 0.0
    %522 = vmatpush2.msra.mxu0 0.0
    %523 = vmatprep.subr.mxu0 0.0
    %524 = vmatpush2.msra.mxu0 0.0
    %525 = vmatprep.subr.mxu0 0.0
    %526 = vmatpush2.msra.mxu0 0.0
    %527 = vmatprep.subr.mxu0 0.0
    %528 = vmatpush2.msra.mxu0 0.0
    %529 = vmatprep.subr.mxu0 0.0
    %530 = vmatpush2.msra.mxu0 0.0
    %531 = vmatprep.subr.mxu0 0.0
    %532 = vmatpush2.msra.mxu0 0.0
    %533 = vmatprep.subr.mxu0 0.0
    %534 = vmatpush2.msra.mxu0 0.0
    %535 = vmatprep.subr.mxu0 0.0
    %536 = vmatpush2.msra.mxu0 0.0
    %537 = vmatprep.subr.mxu0 0.0
    %538 = vmatpush2.msra.mxu0 0.0
    %539 = vmatprep.subr.mxu0 0.0
    %540 = vmatpush2.msra.mxu0 0.0
    %541 = vmatprep.subr.mxu0 0.0
    %542 = vmatpush2.msra.mxu0 0.0
    %543 = vmatprep.mubr.f32.mxu0 0.0
    %544 = vmatmul.mubr.f32.gmra.mxu0 %v477
    %v545 = vpop.f32.mrf.mxu0
    %v546 = vadd.f32 0.0, %v545
    %v547 = vpop.f32.mrf.mxu0
    %v548 = vadd.f32 0.0, %v547
    %549 = vdwg.mxu0
    %v550 = vadd.f32 %v475, %v546
    %v551 = vadd.f32 %v476, %v548
    %v552 = vxor.u32 %v550, 2147483648
    %v553 = vxor.u32 %v551, 2147483648
    %v554 = vmul.f32 %v552, 1.442695
    %v555 = vpow.pop %v554
    %v556 = vmul.f32 %v553, 1.442695
    %v557 = vpow.pop %v556
    %v558 = vadd.f32 %v555, 1.0
    %v559 = vadd.f32 %v557, 1.0
    %v560 = vrcp.pop %v558
    %v561 = vmul.f32 1.0, %v560
    %v562 = vrcp.pop %v559
    %v563 = vmul.f32 1.0, %v562
    %v564 = vtanh.pop %v551
    %v565 = vmul.f32 %v561, %v461
    %v566 = vmul.f32 %v561, %v564
    %568 = vrot.lane.b32.xlu0 %v566, 64
    %v569 = vpop.permute.xlu0 %568
    %v571 = vadd.f32 %v565, %v569
    %v572 = vtanh.pop %v571
    %v573 = vmul.f32 %v563, %v572
    %575 = vrot.lane.b32.xlu0 %v573, 64
    %v576 = vpop.permute.xlu0 %575
    %s578 = scalar_lea.vmem [#allocation3], 16
    %579 = vst.msk [vmem:[%s578] sm:$0xff] %vm80, %v576
    %s580 = scalar_lea.vmem [#allocation3], 40
    %581 = vst.msk [vmem:[%s580] sm:$0xff] %vm360, %v576
    %s582 = smul.u32 3, 2
    %s583 = smul.addr %s582, 8
    %s584 = scalar_lea.vmem [#allocation2], %s583
    %v585 = vld [vmem:[%s584] sm:$0xff]
    %v586 = vld [vmem:[%s584 + $0x8] sm:$0xff]
    %v587 = vsel %vm255, %v576, 0
    %589 = vmatprep.subr.mxu0 0.0
    %590 = vmatpush1.msra.mxu0 0.0
    %591 = vmatprep.subr.mxu0 0.0
    %592 = vmatpush1.msra.mxu0 0.0
    %593 = vmatprep.subr.mxu0 0.0
    %594 = vmatpush1.msra.mxu0 0.0
    %595 = vmatprep.subr.mxu0 0.0
    %596 = vmatpush1.msra.mxu0 0.0
    %597 = vmatprep.subr.mxu0 0.0
    %598 = vmatpush1.msra.mxu0 0.0
    %599 = vmatprep.subr.mxu0 0.0
    %600 = vmatpush1.msra.mxu0 0.0
    %601 = vmatprep.subr.mxu0 0.0
    %602 = vmatpush1.msra.mxu0 0.0
    %603 = vmatprep.subr.mxu0 0.0
    %604 = vmatpush1.msra.mxu0 0.0
    %605 = vmatprep.subr.mxu0 %v249
    %606 = vmatpush1.msra.mxu0 %v248
    %607 = vmatprep.subr.mxu0 %v247
    %608 = vmatpush1.msra.mxu0 %v246
    %609 = vmatprep.subr.mxu0 %v245
    %610 = vmatpush1.msra.mxu0 %v244
    %611 = vmatprep.subr.mxu0 %v243
    %612 = vmatpush1.msra.mxu0 %v242
    %613 = vmatprep.subr.mxu0 %v241
    %614 = vmatpush1.msra.mxu0 %v240
    %615 = vmatprep.subr.mxu0 %v239
    %616 = vmatpush1.msra.mxu0 %v238
    %617 = vmatprep.subr.mxu0 %v237
    %618 = vmatpush1.msra.mxu0 %v236
    %619 = vmatprep.subr.mxu0 %v235
    %620 = vmatpush1.msra.mxu0 %v234
    %621 = vmatprep.subr.mxu0 0.0
    %622 = vmatpush2.msra.mxu0 0.0
    %623 = vmatprep.subr.mxu0 0.0
    %624 = vmatpush2.msra.mxu0 0.0
    %625 = vmatprep.subr.mxu0 0.0
    %626 = vmatpush2.msra.mxu0 0.0
    %627 = vmatprep.subr.mxu0 0.0
    %628 = vmatpush2.msra.mxu0 0.0
    %629 = vmatprep.subr.mxu0 0.0
    %630 = vmatpush2.msra.mxu0 0.0
    %631 = vmatprep.subr.mxu0 0.0
    %632 = vmatpush2.msra.mxu0 0.0
    %633 = vmatprep.subr.mxu0 0.0
    %634 = vmatpush2.msra.mxu0 0.0
    %635 = vmatprep.subr.mxu0 0.0
    %636 = vmatpush2.msra.mxu0 0.0
    %637 = vmatprep.subr.mxu0 0.0
    %638 = vmatpush2.msra.mxu0 0.0
    %639 = vmatprep.subr.mxu0 0.0
    %640 = vmatpush2.msra.mxu0 0.0
    %641 = vmatprep.subr.mxu0 0.0
    %642 = vmatpush2.msra.mxu0 0.0
    %643 = vmatprep.subr.mxu0 0.0
    %644 = vmatpush2.msra.mxu0 0.0
    %645 = vmatprep.subr.mxu0 0.0
    %646 = vmatpush2.msra.mxu0 0.0
    %647 = vmatprep.subr.mxu0 0.0
    %648 = vmatpush2.msra.mxu0 0.0
    %649 = vmatprep.subr.mxu0 0.0
    %650 = vmatpush2.msra.mxu0 0.0
    %651 = vmatprep.subr.mxu0 0.0
    %652 = vmatpush2.msra.mxu0 0.0
    %653 = vmatprep.mubr.f32.mxu0 0.0
    %654 = vmatmul.mubr.f32.gmra.mxu0 %v587
    %v655 = vpop.f32.mrf.mxu0
    %v656 = vadd.f32 0.0, %v655
    %v657 = vpop.f32.mrf.mxu0
    %v658 = vadd.f32 0.0, %v657
    %659 = vdwg.mxu0
    %v660 = vadd.f32 %v585, %v656
    %v661 = vadd.f32 %v586, %v658
    %v662 = vxor.u32 %v660, 2147483648
    %v663 = vxor.u32 %v661, 2147483648
    %v664 = vmul.f32 %v662, 1.442695
    %v665 = vpow.pop %v664
    %v666 = vmul.f32 %v663, 1.442695
    %v667 = vpow.pop %v666
    %v668 = vadd.f32 %v665, 1.0
    %v669 = vadd.f32 %v667, 1.0
    %v670 = vrcp.pop %v668
    %v671 = vmul.f32 1.0, %v670
    %v672 = vrcp.pop %v669
    %v673 = vmul.f32 1.0, %v672
    %v674 = vtanh.pop %v661
    %v675 = vmul.f32 %v671, %v571
    %v676 = vmul.f32 %v671, %v674
    %678 = vrot.lane.b32.xlu0 %v676, 64
    %v679 = vpop.permute.xlu0 %678
    %v681 = vadd.f32 %v675, %v679
    %v682 = vtanh.pop %v681
    %v683 = vmul.f32 %v673, %v682
    %685 = vrot.lane.b32.xlu0 %v683, 64
    %v686 = vpop.permute.xlu0 %685
    %s688 = scalar_lea.vmem [#allocation3], 24
    %689 = vst.msk [vmem:[%s688] sm:$0xff] %vm80, %v686
    %s690 = scalar_lea.vmem [#allocation3], 32
    %691 = vst.msk [vmem:[%s690] sm:$0xff] %vm360, %v686
    %s692 = smul.u32 4, 2
    %s693 = smul.addr %s692, 8
    %s694 = scalar_lea.vmem [#allocation2], %s693
    %v695 = vld [vmem:[%s694] sm:$0xff]
    %v696 = vld [vmem:[%s694 + $0x8] sm:$0xff]
    %v697 = vsel %vm255, %v686, 0
    %699 = vmatprep.subr.mxu0 0.0
    %700 = vmatpush1.msra.mxu0 0.0
    %701 = vmatprep.subr.mxu0 0.0
    %702 = vmatpush1.msra.mxu0 0.0
    %703 = vmatprep.subr.mxu0 0.0
    %704 = vmatpush1.msra.mxu0 0.0
    %705 = vmatprep.subr.mxu0 0.0
    %706 = vmatpush1.msra.mxu0 0.0
    %707 = vmatprep.subr.mxu0 0.0
    %708 = vmatpush1.msra.mxu0 0.0
    %709 = vmatprep.subr.mxu0 0.0
    %710 = vmatpush1.msra.mxu0 0.0
    %711 = vmatprep.subr.mxu0 0.0
    %712 = vmatpush1.msra.mxu0 0.0
    %713 = vmatprep.subr.mxu0 0.0
    %714 = vmatpush1.msra.mxu0 0.0
    %715 = vmatprep.subr.mxu0 %v249
    %716 = vmatpush1.msra.mxu0 %v248
    %717 = vmatprep.subr.mxu0 %v247
    %718 = vmatpush1.msra.mxu0 %v246
    %719 = vmatprep.subr.mxu0 %v245
    %720 = vmatpush1.msra.mxu0 %v244
    %721 = vmatprep.subr.mxu0 %v243
    %722 = vmatpush1.msra.mxu0 %v242
    %723 = vmatprep.subr.mxu0 %v241
    %724 = vmatpush1.msra.mxu0 %v240
    %725 = vmatprep.subr.mxu0 %v239
    %726 = vmatpush1.msra.mxu0 %v238
    %727 = vmatprep.subr.mxu0 %v237
    %728 = vmatpush1.msra.mxu0 %v236
    %729 = vmatprep.subr.mxu0 %v235
    %730 = vmatpush1.msra.mxu0 %v234
    %731 = vmatprep.subr.mxu0 0.0
    %732 = vmatpush2.msra.mxu0 0.0
    %733 = vmatprep.subr.mxu0 0.0
    %734 = vmatpush2.msra.mxu0 0.0
    %735 = vmatprep.subr.mxu0 0.0
    %736 = vmatpush2.msra.mxu0 0.0
    %737 = vmatprep.subr.mxu0 0.0
    %738 = vmatpush2.msra.mxu0 0.0
    %739 = vmatprep.subr.mxu0 0.0
    %740 = vmatpush2.msra.mxu0 0.0
    %741 = vmatprep.subr.mxu0 0.0
    %742 = vmatpush2.msra.mxu0 0.0
    %743 = vmatprep.subr.mxu0 0.0
    %744 = vmatpush2.msra.mxu0 0.0
    %745 = vmatprep.subr.mxu0 0.0
    %746 = vmatpush2.msra.mxu0 0.0
    %747 = vmatprep.subr.mxu0 0.0
    %748 = vmatpush2.msra.mxu0 0.0
    %749 = vmatprep.subr.mxu0 0.0
    %750 = vmatpush2.msra.mxu0 0.0
    %751 = vmatprep.subr.mxu0 0.0
    %752 = vmatpush2.msra.mxu0 0.0
    %753 = vmatprep.subr.mxu0 0.0
    %754 = vmatpush2.msra.mxu0 0.0
    %755 = vmatprep.subr.mxu0 0.0
    %756 = vmatpush2.msra.mxu0 0.0
    %757 = vmatprep.subr.mxu0 0.0
    %758 = vmatpush2.msra.mxu0 0.0
    %759 = vmatprep.subr.mxu0 0.0
    %760 = vmatpush2.msra.mxu0 0.0
    %761 = vmatprep.subr.mxu0 0.0
    %762 = vmatpush2.msra.mxu0 0.0
    %763 = vmatprep.mubr.f32.mxu0 0.0
    %764 = vmatmul.mubr.f32.gmra.mxu0 %v697
    %v765 = vpop.f32.mrf.mxu0
    %v766 = vadd.f32 0.0, %v765
    %v767 = vpop.f32.mrf.mxu0
    %v768 = vadd.f32 0.0, %v767
    %769 = vdwg.mxu0
    %v770 = vadd.f32 %v695, %v766
    %v771 = vadd.f32 %v696, %v768
    %v772 = vxor.u32 %v770, 2147483648
    %v773 = vxor.u32 %v771, 2147483648
    %v774 = vmul.f32 %v772, 1.442695
    %v775 = vpow.pop %v774
    %v776 = vmul.f32 %v773, 1.442695
    %v777 = vpow.pop %v776
    %v778 = vadd.f32 %v775, 1.0
    %v779 = vadd.f32 %v777, 1.0
    %v780 = vrcp.pop %v778
    %v781 = vmul.f32 1.0, %v780
    %v782 = vrcp.pop %v779
    %v783 = vmul.f32 1.0, %v782
    %v784 = vtanh.pop %v771
    %v785 = vmul.f32 %v781, %v681
    %v786 = vmul.f32 %v781, %v784
    %788 = vrot.lane.b32.xlu0 %v786, 64
    %v789 = vpop.permute.xlu0 %788
    %v791 = vadd.f32 %v785, %v789
    %v792 = vtanh.pop %v791
    %v793 = vmul.f32 %v783, %v792
    %795 = vrot.lane.b32.xlu0 %v793, 64
    %v796 = vpop.permute.xlu0 %795
    %798 = vst.msk [vmem:[%s690] sm:$0xff] %vm80, %v796
    %799 = vst.msk [vmem:[%s688] sm:$0xff] %vm360, %v796
    %s800 = smul.u32 5, 2
    %s801 = smul.addr %s800, 8
    %s802 = scalar_lea.vmem [#allocation2], %s801
    %v803 = vld [vmem:[%s802] sm:$0xff]
    %v804 = vld [vmem:[%s802 + $0x8] sm:$0xff]
    %v805 = vsel %vm255, %v796, 0
    %807 = vmatprep.subr.mxu0 0.0
    %808 = vmatpush1.msra.mxu0 0.0
    %809 = vmatprep.subr.mxu0 0.0
    %810 = vmatpush1.msra.mxu0 0.0
    %811 = vmatprep.subr.mxu0 0.0
    %812 = vmatpush1.msra.mxu0 0.0
    %813 = vmatprep.subr.mxu0 0.0
    %814 = vmatpush1.msra.mxu0 0.0
    %815 = vmatprep.subr.mxu0 0.0
    %816 = vmatpush1.msra.mxu0 0.0
    %817 = vmatprep.subr.mxu0 0.0
    %818 = vmatpush1.msra.mxu0 0.0
    %819 = vmatprep.subr.mxu0 0.0
    %820 = vmatpush1.msra.mxu0 0.0
    %821 = vmatprep.subr.mxu0 0.0
    %822 = vmatpush1.msra.mxu0 0.0
    %823 = vmatprep.subr.mxu0 %v249
    %824 = vmatpush1.msra.mxu0 %v248
    %825 = vmatprep.subr.mxu0 %v247
    %826 = vmatpush1.msra.mxu0 %v246
    %827 = vmatprep.subr.mxu0 %v245
    %828 = vmatpush1.msra.mxu0 %v244
    %829 = vmatprep.subr.mxu0 %v243
    %830 = vmatpush1.msra.mxu0 %v242
    %831 = vmatprep.subr.mxu0 %v241
    %832 = vmatpush1.msra.mxu0 %v240
    %833 = vmatprep.subr.mxu0 %v239
    %834 = vmatpush1.msra.mxu0 %v238
    %835 = vmatprep.subr.mxu0 %v237
    %836 = vmatpush1.msra.mxu0 %v236
    %837 = vmatprep.subr.mxu0 %v235
    %838 = vmatpush1.msra.mxu0 %v234
    %839 = vmatprep.subr.mxu0 0.0
    %840 = vmatpush2.msra.mxu0 0.0
    %841 = vmatprep.subr.mxu0 0.0
    %842 = vmatpush2.msra.mxu0 0.0
    %843 = vmatprep.subr.mxu0 0.0
    %844 = vmatpush2.msra.mxu0 0.0
    %845 = vmatprep.subr.mxu0 0.0
    %846 = vmatpush2.msra.mxu0 0.0
    %847 = vmatprep.subr.mxu0 0.0
    %848 = vmatpush2.msra.mxu0 0.0
    %849 = vmatprep.subr.mxu0 0.0
    %850 = vmatpush2.msra.mxu0 0.0
    %851 = vmatprep.subr.mxu0 0.0
    %852 = vmatpush2.msra.mxu0 0.0
    %853 = vmatprep.subr.mxu0 0.0
    %854 = vmatpush2.msra.mxu0 0.0
    %855 = vmatprep.subr.mxu0 0.0
    %856 = vmatpush2.msra.mxu0 0.0
    %857 = vmatprep.subr.mxu0 0.0
    %858 = vmatpush2.msra.mxu0 0.0
    %859 = vmatprep.subr.mxu0 0.0
    %860 = vmatpush2.msra.mxu0 0.0
    %861 = vmatprep.subr.mxu0 0.0
    %862 = vmatpush2.msra.mxu0 0.0
    %863 = vmatprep.subr.mxu0 0.0
    %864 = vmatpush2.msra.mxu0 0.0
    %865 = vmatprep.subr.mxu0 0.0
    %866 = vmatpush2.msra.mxu0 0.0
    %867 = vmatprep.subr.mxu0 0.0
    %868 = vmatpush2.msra.mxu0 0.0
    %869 = vmatprep.subr.mxu0 0.0
    %870 = vmatpush2.msra.mxu0 0.0
    %871 = vmatprep.mubr.f32.mxu0 0.0
    %872 = vmatmul.mubr.f32.gmra.mxu0 %v805
    %v873 = vpop.f32.mrf.mxu0
    %v874 = vadd.f32 0.0, %v873
    %v875 = vpop.f32.mrf.mxu0
    %v876 = vadd.f32 0.0, %v875
    %877 = vdwg.mxu0
    %v878 = vadd.f32 %v803, %v874
    %v879 = vadd.f32 %v804, %v876
    %v880 = vxor.u32 %v878, 2147483648
    %v881 = vxor.u32 %v879, 2147483648
    %v882 = vmul.f32 %v880, 1.442695
    %v883 = vpow.pop %v882
    %v884 = vmul.f32 %v881, 1.442695
    %v885 = vpow.pop %v884
    %v886 = vadd.f32 %v883, 1.0
    %v887 = vadd.f32 %v885, 1.0
    %v888 = vrcp.pop %v886
    %v889 = vmul.f32 1.0, %v888
    %v890 = vrcp.pop %v887
    %v891 = vmul.f32 1.0, %v890
    %v892 = vtanh.pop %v879
    %v893 = vmul.f32 %v889, %v791
    %v894 = vmul.f32 %v889, %v892
    %896 = vrot.lane.b32.xlu0 %v894, 64
    %v897 = vpop.permute.xlu0 %896
    %v899 = vadd.f32 %v893, %v897
    %v900 = vtanh.pop %v899
    %v901 = vmul.f32 %v891, %v900
    %903 = vrot.lane.b32.xlu0 %v901, 64
    %v904 = vpop.permute.xlu0 %903
    %906 = vst.msk [vmem:[%s580] sm:$0xff] %vm80, %v904
    %907 = vst.msk [vmem:[%s578] sm:$0xff] %vm360, %v904
    %s908 = smul.u32 6, 2
    %s909 = smul.addr %s908, 8
    %s910 = scalar_lea.vmem [#allocation2], %s909
    %v911 = vld [vmem:[%s910] sm:$0xff]
    %v912 = vld [vmem:[%s910 + $0x8] sm:$0xff]
    %v913 = vsel %vm255, %v904, 0
    %915 = vmatprep.subr.mxu0 0.0
    %916 = vmatpush1.msra.mxu0 0.0
    %917 = vmatprep.subr.mxu0 0.0
    %918 = vmatpush1.msra.mxu0 0.0
    %919 = vmatprep.subr.mxu0 0.0
    %920 = vmatpush1.msra.mxu0 0.0
    %921 = vmatprep.subr.mxu0 0.0
    %922 = vmatpush1.msra.mxu0 0.0
    %923 = vmatprep.subr.mxu0 0.0
    %924 = vmatpush1.msra.mxu0 0.0
    %925 = vmatprep.subr.mxu0 0.0
    %926 = vmatpush1.msra.mxu0 0.0
    %927 = vmatprep.subr.mxu0 0.0
    %928 = vmatpush1.msra.mxu0 0.0
    %929 = vmatprep.subr.mxu0 0.0
    %930 = vmatpush1.msra.mxu0 0.0
    %931 = vmatprep.subr.mxu0 %v249
    %932 = vmatpush1.msra.mxu0 %v248
    %933 = vmatprep.subr.mxu0 %v247
    %934 = vmatpush1.msra.mxu0 %v246
    %935 = vmatprep.subr.mxu0 %v245
    %936 = vmatpush1.msra.mxu0 %v244
    %937 = vmatprep.subr.mxu0 %v243
    %938 = vmatpush1.msra.mxu0 %v242
    %939 = vmatprep.subr.mxu0 %v241
    %940 = vmatpush1.msra.mxu0 %v240
    %941 = vmatprep.subr.mxu0 %v239
    %942 = vmatpush1.msra.mxu0 %v238
    %943 = vmatprep.subr.mxu0 %v237
    %944 = vmatpush1.msra.mxu0 %v236
    %945 = vmatprep.subr.mxu0 %v235
    %946 = vmatpush1.msra.mxu0 %v234
    %947 = vmatprep.subr.mxu0 0.0
    %948 = vmatpush2.msra.mxu0 0.0
    %949 = vmatprep.subr.mxu0 0.0
    %950 = vmatpush2.msra.mxu0 0.0
    %951 = vmatprep.subr.mxu0 0.0
    %952 = vmatpush2.msra.mxu0 0.0
    %953 = vmatprep.subr.mxu0 0.0
    %954 = vmatpush2.msra.mxu0 0.0
    %955 = vmatprep.subr.mxu0 0.0
    %956 = vmatpush2.msra.mxu0 0.0
    %957 = vmatprep.subr.mxu0 0.0
    %958 = vmatpush2.msra.mxu0 0.0
    %959 = vmatprep.subr.mxu0 0.0
    %960 = vmatpush2.msra.mxu0 0.0
    %961 = vmatprep.subr.mxu0 0.0
    %962 = vmatpush2.msra.mxu0 0.0
    %963 = vmatprep.subr.mxu0 0.0
    %964 = vmatpush2.msra.mxu0 0.0
    %965 = vmatprep.subr.mxu0 0.0
    %966 = vmatpush2.msra.mxu0 0.0
    %967 = vmatprep.subr.mxu0 0.0
    %968 = vmatpush2.msra.mxu0 0.0
    %969 = vmatprep.subr.mxu0 0.0
    %970 = vmatpush2.msra.mxu0 0.0
    %971 = vmatprep.subr.mxu0 0.0
    %972 = vmatpush2.msra.mxu0 0.0
    %973 = vmatprep.subr.mxu0 0.0
    %974 = vmatpush2.msra.mxu0 0.0
    %975 = vmatprep.subr.mxu0 0.0
    %976 = vmatpush2.msra.mxu0 0.0
    %977 = vmatprep.subr.mxu0 0.0
    %978 = vmatpush2.msra.mxu0 0.0
    %979 = vmatprep.mubr.f32.mxu0 0.0
    %980 = vmatmul.mubr.f32.gmra.mxu0 %v913
    %v981 = vpop.f32.mrf.mxu0
    %v982 = vadd.f32 0.0, %v981
    %v983 = vpop.f32.mrf.mxu0
    %v984 = vadd.f32 0.0, %v983
    %985 = vdwg.mxu0
    %v986 = vadd.f32 %v911, %v982
    %v987 = vadd.f32 %v912, %v984
    %v988 = vxor.u32 %v986, 2147483648
    %v989 = vxor.u32 %v987, 2147483648
    %v990 = vmul.f32 %v988, 1.442695
    %v991 = vpow.pop %v990
    %v992 = vmul.f32 %v989, 1.442695
    %v993 = vpow.pop %v992
    %v994 = vadd.f32 %v991, 1.0
    %v995 = vadd.f32 %v993, 1.0
    %v996 = vrcp.pop %v994
    %v997 = vmul.f32 1.0, %v996
    %v998 = vrcp.pop %v995
    %v999 = vmul.f32 1.0, %v998
    %v1000 = vtanh.pop %v987
    %v1001 = vmul.f32 %v997, %v899
    %v1002 = vmul.f32 %v997, %v1000
    %1004 = vrot.lane.b32.xlu0 %v1002, 64
    %v1005 = vpop.permute.xlu0 %1004
    %v1007 = vadd.f32 %v1001, %v1005
    %v1008 = vtanh.pop %v1007
    %v1009 = vmul.f32 %v999, %v1008
    %1011 = vrot.lane.b32.xlu0 %v1009, 64
    %v1012 = vpop.permute.xlu0 %1011
    %1014 = vst.msk [vmem:[%s470] sm:$0xff] %vm80, %v1012
    %1015 = vst.msk [vmem:[%s468] sm:$0xff] %vm360, %v1012
    %s1016 = smul.u32 7, 2
    %s1017 = smul.addr %s1016, 8
    %s1018 = scalar_lea.vmem [#allocation2], %s1017
    %v1019 = vld [vmem:[%s1018] sm:$0xff]
    %v1020 = vld [vmem:[%s1018 + $0x8] sm:$0xff]
    %v1021 = vsel %vm255, %v1012, 0
    %1023 = vmatprep.subr.mxu0 0.0
    %1024 = vmatpush1.msra.mxu0 0.0
    %1025 = vmatprep.subr.mxu0 0.0
    %1026 = vmatpush1.msra.mxu0 0.0
    %1027 = vmatprep.subr.mxu0 0.0
    %1028 = vmatpush1.msra.mxu0 0.0
    %1029 = vmatprep.subr.mxu0 0.0
    %1030 = vmatpush1.msra.mxu0 0.0
    %1031 = vmatprep.subr.mxu0 0.0
    %1032 = vmatpush1.msra.mxu0 0.0
    %1033 = vmatprep.subr.mxu0 0.0
    %1034 = vmatpush1.msra.mxu0 0.0
    %1035 = vmatprep.subr.mxu0 0.0
    %1036 = vmatpush1.msra.mxu0 0.0
    %1037 = vmatprep.subr.mxu0 0.0
    %1038 = vmatpush1.msra.mxu0 0.0
    %1039 = vmatprep.subr.mxu0 %v249
    %1040 = vmatpush1.msra.mxu0 %v248
    %1041 = vmatprep.subr.mxu0 %v247
    %1042 = vmatpush1.msra.mxu0 %v246
    %1043 = vmatprep.subr.mxu0 %v245
    %1044 = vmatpush1.msra.mxu0 %v244
    %1045 = vmatprep.subr.mxu0 %v243
    %1046 = vmatpush1.msra.mxu0 %v242
    %1047 = vmatprep.subr.mxu0 %v241
    %1048 = vmatpush1.msra.mxu0 %v240
    %1049 = vmatprep.subr.mxu0 %v239
    %1050 = vmatpush1.msra.mxu0 %v238
    %1051 = vmatprep.subr.mxu0 %v237
    %1052 = vmatpush1.msra.mxu0 %v236
    %1053 = vmatprep.subr.mxu0 %v235
    %1054 = vmatpush1.msra.mxu0 %v234
    %1055 = vmatprep.subr.mxu0 0.0
    %1056 = vmatpush2.msra.mxu0 0.0
    %1057 = vmatprep.subr.mxu0 0.0
    %1058 = vmatpush2.msra.mxu0 0.0
    %1059 = vmatprep.subr.mxu0 0.0
    %1060 = vmatpush2.msra.mxu0 0.0
    %1061 = vmatprep.subr.mxu0 0.0
    %1062 = vmatpush2.msra.mxu0 0.0
    %1063 = vmatprep.subr.mxu0 0.0
    %1064 = vmatpush2.msra.mxu0 0.0
    %1065 = vmatprep.subr.mxu0 0.0
    %1066 = vmatpush2.msra.mxu0 0.0
    %1067 = vmatprep.subr.mxu0 0.0
    %1068 = vmatpush2.msra.mxu0 0.0
    %1069 = vmatprep.subr.mxu0 0.0
    %1070 = vmatpush2.msra.mxu0 0.0
    %1071 = vmatprep.subr.mxu0 0.0
    %1072 = vmatpush2.msra.mxu0 0.0
    %1073 = vmatprep.subr.mxu0 0.0
    %1074 = vmatpush2.msra.mxu0 0.0
    %1075 = vmatprep.subr.mxu0 0.0
    %1076 = vmatpush2.msra.mxu0 0.0
    %1077 = vmatprep.subr.mxu0 0.0
    %1078 = vmatpush2.msra.mxu0 0.0
    %1079 = vmatprep.subr.mxu0 0.0
    %1080 = vmatpush2.msra.mxu0 0.0
    %1081 = vmatprep.subr.mxu0 0.0
    %1082 = vmatpush2.msra.mxu0 0.0
    %1083 = vmatprep.subr.mxu0 0.0
    %1084 = vmatpush2.msra.mxu0 0.0
    %1085 = vmatprep.subr.mxu0 0.0
    %1086 = vmatpush2.msra.mxu0 0.0
    %1087 = vmatprep.mubr.f32.mxu0 0.0
    %1088 = vmatmul.mubr.f32.gmra.mxu0 %v1021
    %v1089 = vpop.f32.mrf.mxu0
    %v1090 = vadd.f32 0.0, %v1089
    %v1091 = vpop.f32.mrf.mxu0
    %v1092 = vadd.f32 0.0, %v1091
    %1093 = vdwg.mxu0
    %v1094 = vadd.f32 %v1019, %v1090
    %v1095 = vadd.f32 %v1020, %v1092
    %v1096 = vxor.u32 %v1094, 2147483648
    %v1097 = vxor.u32 %v1095, 2147483648
    %v1098 = vmul.f32 %v1096, 1.442695
    %v1099 = vpow.pop %v1098
    %v1100 = vmul.f32 %v1097, 1.442695
    %v1101 = vpow.pop %v1100
    %v1102 = vadd.f32 %v1099, 1.0
    %v1103 = vadd.f32 %v1101, 1.0
    %v1104 = vrcp.pop %v1102
    %v1105 = vmul.f32 1.0, %v1104
    %v1106 = vrcp.pop %v1103
    %v1107 = vmul.f32 1.0, %v1106
    %v1108 = vtanh.pop %v1095
    %v1109 = vmul.f32 %v1105, %v1007
    %v1110 = vmul.f32 %v1105, %v1108
    %1112 = vrot.lane.b32.xlu0 %v1110, 64
    %v1113 = vpop.permute.xlu0 %1112
    %v1115 = vadd.f32 %v1109, %v1113
    %v1116 = vtanh.pop %v1115
    %v1117 = vmul.f32 %v1107, %v1116
    %1119 = vrot.lane.b32.xlu0 %v1117, 64
    %v1120 = vpop.permute.xlu0 %1119
    %1122 = vst.msk [vmem:[%s359] sm:$0xff] %vm80, %v1120
    %1123 = vst.msk [vmem:[#allocation3] sm:$0xff] %vm360, %v1120
    %v1124 = vld [vmem:[#allocation3] sm:$0xff]
    %v1125 = vld [vmem:[#allocation3 + $0x8] sm:$0xff]
    %v1126 = vld [vmem:[#allocation3 + $0x10] sm:$0xff]
    %v1127 = vld [vmem:[#allocation3 + $0x18] sm:$0xff]
    %v1128 = vld [vmem:[#allocation3 + $0x20] sm:$0xff]
    %v1129 = vld [vmem:[#allocation3 + $0x28] sm:$0xff]
    %v1130 = vld [vmem:[#allocation3 + $0x30] sm:$0xff]
    %v1131 = vld [vmem:[#allocation3 + $0x38] sm:$0xff]
    %v1132 = vld [vmem:[#allocation7] sm:$0xff]
    %v1133 = vld [vmem:[#allocation7 + $0x8] sm:$0xff]
    %v1134 = vld [vmem:[#allocation7 + $0x10] sm:$0xff]
    %v1135 = vld [vmem:[#allocation7 + $0x18] sm:$0xff]
    %v1136 = vld [vmem:[#allocation7 + $0x20] sm:$0xff]
    %v1137 = vld [vmem:[#allocation7 + $0x28] sm:$0xff]
    %v1138 = vld [vmem:[#allocation7 + $0x30] sm:$0xff]
    %v1139 = vld [vmem:[#allocation7 + $0x38] sm:$0xff]
    %v1140 = vld [vmem:[%s5] sm:$0x1]
    %v1142 = vlaneseq
    %v1143 = vshrl.u32 %v1142, 7
    %v1144 = vsub.s32 0, %v1143
    %v1145 = vrot.slane %v1140, %v1144
    %v1148 = vsel %vm255, %v1124, 0
    %v1151 = vsel %vm255, %v1125, 0
    %v1154 = vsel %vm255, %v1126, 0
    %v1157 = vsel %vm255, %v1127, 0
    %v1160 = vsel %vm255, %v1128, 0
    %v1163 = vsel %vm255, %v1129, 0
    %v1166 = vsel %vm255, %v1130, 0
    %v1169 = vsel %vm255, %v1131, 0
    %1171 = vmatprep.subr.mxu0 0.0
    %1172 = vmatpush1.msra.mxu0 0.0
    %1173 = vmatprep.subr.mxu0 0.0
    %1174 = vmatpush1.msra.mxu0 0.0
    %1175 = vmatprep.subr.mxu0 0.0
    %1176 = vmatpush1.msra.mxu0 0.0
    %1177 = vmatprep.subr.mxu0 0.0
    %1178 = vmatpush1.msra.mxu0 0.0
    %1179 = vmatprep.subr.mxu0 0.0
    %1180 = vmatpush1.msra.mxu0 0.0
    %1181 = vmatprep.subr.mxu0 0.0
    %1182 = vmatpush1.msra.mxu0 0.0
    %1183 = vmatprep.subr.mxu0 0.0
    %1184 = vmatpush1.msra.mxu0 0.0
    %1185 = vmatprep.subr.mxu0 0.0
    %1186 = vmatpush1.msra.mxu0 0.0
    %1187 = vmatprep.subr.mxu0 0.0
    %1188 = vmatpush1.msra.mxu0 %v1139
    %1189 = vmatprep.subr.mxu0 0.0
    %1190 = vmatpush1.msra.mxu0 %v1138
    %1191 = vmatprep.subr.mxu0 0.0
    %1192 = vmatpush1.msra.mxu0 %v1137
    %1193 = vmatprep.subr.mxu0 0.0
    %1194 = vmatpush1.msra.mxu0 %v1136
    %1195 = vmatprep.subr.mxu0 0.0
    %1196 = vmatpush1.msra.mxu0 %v1135
    %1197 = vmatprep.subr.mxu0 0.0
    %1198 = vmatpush1.msra.mxu0 %v1134
    %1199 = vmatprep.subr.mxu0 0.0
    %1200 = vmatpush1.msra.mxu0 %v1133
    %1201 = vmatprep.subr.mxu0 0.0
    %1202 = vmatpush1.msra.mxu0 %v1132
    %1203 = vmatprep.subr.mxu0 0.0
    %1204 = vmatpush2.msra.mxu0 0.0
    %1205 = vmatprep.subr.mxu0 0.0
    %1206 = vmatpush2.msra.mxu0 0.0
    %1207 = vmatprep.subr.mxu0 0.0
    %1208 = vmatpush2.msra.mxu0 0.0
    %1209 = vmatprep.subr.mxu0 0.0
    %1210 = vmatpush2.msra.mxu0 0.0
    %1211 = vmatprep.subr.mxu0 0.0
    %1212 = vmatpush2.msra.mxu0 0.0
    %1213 = vmatprep.subr.mxu0 0.0
    %1214 = vmatpush2.msra.mxu0 0.0
    %1215 = vmatprep.subr.mxu0 0.0
    %1216 = vmatpush2.msra.mxu0 0.0
    %1217 = vmatprep.subr.mxu0 0.0
    %1218 = vmatpush2.msra.mxu0 0.0
    %1219 = vmatprep.subr.mxu0 0.0
    %1220 = vmatpush2.msra.mxu0 0.0
    %1221 = vmatprep.subr.mxu0 0.0
    %1222 = vmatpush2.msra.mxu0 0.0
    %1223 = vmatprep.subr.mxu0 0.0
    %1224 = vmatpush2.msra.mxu0 0.0
    %1225 = vmatprep.subr.mxu0 0.0
    %1226 = vmatpush2.msra.mxu0 0.0
    %1227 = vmatprep.subr.mxu0 0.0
    %1228 = vmatpush2.msra.mxu0 0.0
    %1229 = vmatprep.subr.mxu0 0.0
    %1230 = vmatpush2.msra.mxu0 0.0
    %1231 = vmatprep.subr.mxu0 0.0
    %1232 = vmatpush2.msra.mxu0 0.0
    %1233 = vmatprep.subr.mxu0 0.0
    %1234 = vmatpush2.msra.mxu0 0.0
    %1235 = vmatprep.mubr.f32.mxu0 0.0
    %1236 = vmatmul.mubr.f32.gmra.mxu0 %v1148
    %v1237 = vpop.f32.mrf.mxu0
    %v1238 = vadd.f32 %v1145, %v1237
    %v1239 = vpop.f32.mrf.mxu0
    %1240 = vmatprep.mubr.f32.mxu0 0.0
    %1241 = vmatmul.mubr.f32.gmra.mxu0 %v1151
    %v1242 = vpop.f32.mrf.mxu0
    %v1243 = vadd.f32 %v1145, %v1242
    %v1244 = vpop.f32.mrf.mxu0
    %1245 = vmatprep.mubr.f32.mxu0 0.0
    %1246 = vmatmul.mubr.f32.gmra.mxu0 %v1154
    %v1247 = vpop.f32.mrf.mxu0
    %v1248 = vadd.f32 %v1145, %v1247
    %v1249 = vpop.f32.mrf.mxu0
    %1250 = vmatprep.mubr.f32.mxu0 0.0
    %1251 = vmatmul.mubr.f32.gmra.mxu0 %v1157
    %v1252 = vpop.f32.mrf.mxu0
    %v1253 = vadd.f32 %v1145, %v1252
    %v1254 = vpop.f32.mrf.mxu0
    %1255 = vmatprep.mubr.f32.mxu0 0.0
    %1256 = vmatmul.mubr.f32.gmra.mxu0 %v1160
    %v1257 = vpop.f32.mrf.mxu0
    %v1258 = vadd.f32 %v1145, %v1257
    %v1259 = vpop.f32.mrf.mxu0
    %1260 = vmatprep.mubr.f32.mxu0 0.0
    %1261 = vmatmul.mubr.f32.gmra.mxu0 %v1163
    %v1262 = vpop.f32.mrf.mxu0
    %v1263 = vadd.f32 %v1145, %v1262
    %v1264 = vpop.f32.mrf.mxu0
    %1265 = vmatprep.mubr.f32.mxu0 0.0
    %1266 = vmatmul.mubr.f32.gmra.mxu0 %v1166
    %v1267 = vpop.f32.mrf.mxu0
    %v1268 = vadd.f32 %v1145, %v1267
    %v1269 = vpop.f32.mrf.mxu0
    %1270 = vmatprep.mubr.f32.mxu0 0.0
    %1271 = vmatmul.mubr.f32.gmra.mxu0 %v1169
    %v1272 = vpop.f32.mrf.mxu0
    %v1273 = vadd.f32 %v1145, %v1272
    %v1274 = vpop.f32.mrf.mxu0
    %1275 = vdwg.mxu0
    %1276 = vst [vmem:[#allocation9] sm:$0xff] %v1238
    %1277 = vst [vmem:[#allocation9 + $0x8] sm:$0xff] %v1243
    %1278 = vst [vmem:[#allocation9 + $0x10] sm:$0xff] %v1248
    %1279 = vst [vmem:[#allocation9 + $0x18] sm:$0xff] %v1253
    %1280 = vst [vmem:[#allocation9 + $0x20] sm:$0xff] %v1258
    %1281 = vst [vmem:[#allocation9 + $0x28] sm:$0xff] %v1263
    %1282 = vst [vmem:[#allocation9 + $0x30] sm:$0xff] %v1268
    %1283 = vst [vmem:[#allocation9 + $0x38] sm:$0xff] %v1273
    // Predicated region
    $region34: #{tpu_custom_call.1} parent=1 // pred_check
      _
    $region35: #{tpu_custom_call.1} parent=1 // pred_check_branch
      %1285 = sbr.rel (0) target = $region37
    $region36: #{tpu_custom_call.1} parent=1 // pred_region
      %s1287 = ssub.s32 1024, 1024
      %1288 = vsyncadd [#allocation6], %s1287
      %s1289 = sshll.u32 [#allocation9], 4
      %s1290 = int_to_ptr.vmem [resolvable:$true] %s1289
      %1295 = dma.vmem_to_hbm [thread:$0]  %s1290, 1024, %s6, [#allocation6], 128, 128, 8
    $region37: #{tpu_custom_call.1} parent=1 // pred_fallthru
      _
    // Predicated region
    $region38: #{tpu_custom_call.1} parent=1 // pred_check
      _
    $region39: #{tpu_custom_call.1} parent=1 // pred_check_branch
      %1297 = sbr.rel (0) target = $region41
    $region40: #{tpu_custom_call.1} parent=1 // pred_region
      %1298 = dma.done [#allocation6], 1024
    $region41: #{tpu_custom_call.1} parent=1 // pred_fallthru
      _
    %1299 = vsyncpa [#allocation5], 1
    %1300 = vsyncpa [#allocation8], 1
    %1301 = vsyncpa [#allocation6], 1

</llo_original>
